<compile_context>
chip_gen: v6e
topology: v6e:2x2x1
jax: 0.10.0
libtpu: 0.0.40
codegen_flags: <defaults>
</compile_context>

<pallas_src>
import functools
import jax
import jax.numpy as jnp
from jax.experimental import pallas as pl
from jax.experimental.pallas import tpu as pltpu


def _layer_norm(x, w, b, eps=1e-5):
    # Two-pass E[(x - mu)^2] variance (numerically safe).
    mu = jnp.mean(x, axis=-1, keepdims=True)
    xc = x - mu
    var = jnp.mean(xc * xc, axis=-1, keepdims=True)
    return xc * jax.lax.rsqrt(var + eps) * w + b


def _decoder_kernel(tgt_ref, wqkv_ref, bqkv_ref, wo_ref, bo_ref,
                    ln1w_ref, ln1b_ref, ff1w_ref, ff1b_ref,
                    ff2w_ref, ff2b_ref, ln2w_ref, ln2b_ref,
                    lnfw_ref, lnfb_ref, out_ref,
                    x_ref, attn_ref, *, nhead, head_dim):
    l = pl.program_id(1)
    Bt, S, D = tgt_ref.shape
    M = Bt * S

    # First layer of each batch tile: load tgt into the resident activation buffer.
    @pl.when(l == 0)
    def _():
        x_ref[...] = tgt_ref[...].reshape(M, D)

    x = x_ref[...]                                     # (Bt*S, D) f32
    scale = jnp.float32(1.0 / (head_dim ** 0.5))

    # Boolean causal mask regenerated per layer (cheap iota + compare; no S*S f32 scratch).
    rows = jax.lax.broadcasted_iota(jnp.int32, (S, S), 0)
    cols = jax.lax.broadcasted_iota(jnp.int32, (S, S), 1)
    causal = rows >= cols
    neg_inf = jnp.float32(-1e30)

    # ---- fused QKV projection: one (Bt*S, D) x (D, 3D) matmul ----
    x_bf = x.astype(jnp.bfloat16)
    qkv = jnp.dot(x_bf, wqkv_ref[...],
                  preferred_element_type=jnp.float32) + bqkv_ref[...]
    q = qkv[:, 0 * D:1 * D].astype(jnp.bfloat16)       # static lane slices (views)
    k = qkv[:, 1 * D:2 * D].astype(jnp.bfloat16)
    v = qkv[:, 2 * D:3 * D].astype(jnp.bfloat16)

    # ---- causal multi-head self-attention; head outputs staged into lane slabs ----
    for b in range(Bt):                                # static, small
        rs = slice(b * S, (b + 1) * S)
        qb, kb, vb = q[rs], k[rs], v[rs]
        for h in range(nhead):                         # static head loop, static slices
            cs = slice(h * head_dim, (h + 1) * head_dim)
            qh, kh, vh = qb[:, cs], kb[:, cs], vb[:, cs]
            s = jnp.einsum('qe,ke->qk', qh, kh,
                           preferred_element_type=jnp.float32) * scale
            s = jnp.where(causal, s, neg_inf)
            m = jnp.max(s, axis=-1, keepdims=True)     # f32 softmax numerics
            e = jnp.exp(s - m)
            denom = jnp.sum(e, axis=-1, keepdims=True)
            p = (e * pl.reciprocal(denom, approx=True)).astype(jnp.bfloat16)
            ho = jnp.dot(p, vh, preferred_element_type=jnp.float32)   # (S, hd)
            attn_ref[rs, cs] = ho.astype(jnp.bfloat16)

    # One full-depth output projection: (Bt*S, D) x (D, D).
    attn = jnp.dot(attn_ref[...], wo_ref[...],
                   preferred_element_type=jnp.float32) + bo_ref[...]

    # ---- residual + post-norm + FFN (ReLU) ----
    x = _layer_norm(x + attn, ln1w_ref[...], ln1b_ref[...])
    h1 = jnp.maximum(
        jnp.dot(x.astype(jnp.bfloat16), ff1w_ref[...],
                preferred_element_type=jnp.float32) + ff1b_ref[...], 0.0)
    ff = jnp.dot(h1.astype(jnp.bfloat16), ff2w_ref[...],
                 preferred_element_type=jnp.float32) + ff2b_ref[...]
    x = _layer_norm(x + ff, ln2w_ref[...], ln2b_ref[...])

    x_ref[...] = x

    # Final layer: apply the outer `norm` and emit this batch tile's output.
    @pl.when(l == pl.num_programs(1) - 1)
    def _():
        y = _layer_norm(x, lnfw_ref[...], lnfb_ref[...])
        out_ref[...] = y.reshape(Bt, S, D).astype(out_ref.dtype)


def _pick_vmem_limit():
    cap = 64 * 1024 * 1024
    try:
        info = pltpu.get_tpu_info()
        cap = int(getattr(info, 'vmem_capacity_bytes', cap))
    except Exception:
        pass
    limit = min(int(cap * 3 // 4), 100 * 1024 * 1024)
    return max(limit, 32 * 1024 * 1024)


def transformer_decoder(tgt, kp, *, nhead, batch_tile=None):
    """kp: kernel-layout params from prepare_params() (bf16 (in,out) weights)."""
    B, S, D = tgt.shape
    L = kp['wqkv'].shape[0]
    FF = kp['ff1w'].shape[2]
    hd = D // nhead

    # Largest batch tile <= 8 that divides B (amortizes per-layer weight DMA).
    if batch_tile is None:
        batch_tile = min(B, 8)
        while B % batch_tile:
            batch_tile -= 1
    assert B % batch_tile == 0
    Bt = batch_tile

    kernel = functools.partial(_decoder_kernel, nhead=nhead, head_dim=hd)

    def per_layer(shape):
        nd = len(shape)
        return pl.BlockSpec((None,) + tuple(shape),
                            lambda b, l, _nd=nd: (l,) + (0,) * _nd)

    in_specs = [
        pl.BlockSpec((Bt, S, D), lambda b, l: (b, 0, 0)),       # tgt (batch tile)
        per_layer((D, 3 * D)), per_layer((1, 3 * D)),           # fused Wqkv, bqkv
        per_layer((D, D)), per_layer((1, D)),                   # Wo, bo
        per_layer((1, D)), per_layer((1, D)),                   # LN1 w, b
        per_layer((D, FF)), per_layer((1, FF)),                 # FFN linear1 W, b
        per_layer((FF, D)), per_layer((1, D)),                  # FFN linear2 W, b
        per_layer((1, D)), per_layer((1, D)),                   # LN2 w, b
        pl.BlockSpec((1, D), lambda b, l: (0, 0)),              # final norm w
        pl.BlockSpec((1, D), lambda b, l: (0, 0)),              # final norm b
    ]
    out_specs = pl.BlockSpec((Bt, S, D), lambda b, l: (b, 0, 0))

    # Advisory cost estimate for the XLA scheduler.
    flops_layer = (2 * S * D * 3 * D          # fused qkv projection
                   + 4 * S * S * D            # scores + PV over all heads
                   + 2 * S * D * D            # output projection
                   + 4 * S * D * FF)          # FFN
    flops = int(B * L * flops_layer)
    transcendentals = int(B * L * (nhead * S * S + nhead * S + 2 * S))
    weight_bytes = sum(int(v.size) * v.dtype.itemsize for v in kp.values())
    bytes_accessed = int((B // Bt) * weight_bytes + 2 * B * S * D * 4)
    cost = pl.CostEstimate(flops=flops, transcendentals=transcendentals,
                           bytes_accessed=bytes_accessed)

    return pl.pallas_call(
        kernel,
        grid=(B // Bt, L),
        in_specs=in_specs,
        out_specs=out_specs,
        out_shape=jax.ShapeDtypeStruct((B, S, D), jnp.float32),
        scratch_shapes=[pltpu.VMEM((Bt * S, D), jnp.float32),    # resident activation
                        pltpu.VMEM((Bt * S, D), jnp.bfloat16)],  # staged head outputs
        compiler_params=pltpu.CompilerParams(
            dimension_semantics=("parallel", "arbitrary"),
            vmem_limit_bytes=_pick_vmem_limit()),
        cost_estimate=cost,
    )(tgt, kp['wqkv'], kp['bqkv'], kp['wo'], kp['bo'],
      kp['ln1w'], kp['ln1b'], kp['ff1w'], kp['ff1b'],
      kp['ff2w'], kp['ff2b'], kp['ln2w'], kp['ln2b'],
      kp['lnfw'], kp['lnfb'])


def init_params(key, num_layers, d_model, dim_ff):
    """PyTorch-layout (out_features, in_features) f32 parameters."""
    ks = jax.random.split(key, 8)
    s = 0.05
    p = {
        'ipw':  jax.random.normal(ks[0], (num_layers, 3 * d_model, d_model)) * s,
        'ipb':  jax.random.normal(ks[1], (num_layers, 1, 3 * d_model)) * s,
        'opw':  jax.random.normal(ks[2], (num_layers, d_model, d_model)) * s,
        'opb':  jax.random.normal(ks[3], (num_layers, 1, d_model)) * s,
        'ln1w': jnp.ones((num_layers, 1, d_model)),
        'ln1b': jnp.zeros((num_layers, 1, d_model)),
        'ff1w': jax.random.normal(ks[4], (num_layers, dim_ff, d_model)) * s,
        'ff1b': jax.random.normal(ks[5], (num_layers, 1, dim_ff)) * s,
        'ff2w': jax.random.normal(ks[6], (num_layers, d_model, dim_ff)) * s,
        'ff2b': jax.random.normal(ks[7], (num_layers, 1, d_model)) * s,
        'ln2w': jnp.ones((num_layers, 1, d_model)),
        'ln2b': jnp.zeros((num_layers, 1, d_model)),
        'lnfw': jnp.ones((1, d_model)),
        'lnfb': jnp.zeros((1, d_model)),
    }
    return jax.tree.map(lambda a: a.astype(jnp.float32), p)


def prepare_params(p):
    """Transpose to (in, out) layout, keep QKV fused and Wo un-split, cast weights to bf16."""
    bf = jnp.bfloat16
    return {
        'wqkv': jnp.swapaxes(p['ipw'], 1, 2).astype(bf),    # (L, D, 3D)
        'bqkv': p['ipb'],                                   # (L, 1, 3D) f32
        'wo':   jnp.swapaxes(p['opw'], 1, 2).astype(bf),    # (L, D, D)
        'bo':   p['opb'],
        'ln1w': p['ln1w'], 'ln1b': p['ln1b'],
        'ff1w': jnp.swapaxes(p['ff1w'], 1, 2).astype(bf),   # (L, D, FF)
        'ff1b': p['ff1b'],
        'ff2w': jnp.swapaxes(p['ff2w'], 1, 2).astype(bf),   # (L, FF, D)
        'ff2b': p['ff2b'],
        'ln2w': p['ln2w'], 'ln2b': p['ln2b'],
        'lnfw': p['lnfw'], 'lnfb': p['lnfb'],
    }


def reference(tgt, kp, *, nhead):
    """Pure-JAX f32 mirror of the kernel math, using the same (bf16-quantized) weights."""
    f32 = lambda a: a.astype(jnp.float32)
    x = tgt
    B, S, D = x.shape
    hd = D // nhead
    L = kp['wqkv'].shape[0]
    mask = jnp.arange(S)[:, None] >= jnp.arange(S)[None, :]
    scale = 1.0 / (hd ** 0.5)
    for l in range(L):
        qkv = jnp.einsum('bsd,de->bse', x, f32(kp['wqkv'][l])) + kp['bqkv'][l]
        q, k, v = qkv[..., :D], qkv[..., D:2 * D], qkv[..., 2 * D:]
        heads = []
        for h in range(nhead):
            sl = slice(h * hd, (h + 1) * hd)
            s = jnp.einsum('bqe,bke->bqk', q[..., sl], k[..., sl]) * scale
            s = jnp.where(mask, s, -1e30)
            p = jax.nn.softmax(s, axis=-1)
            heads.append(jnp.einsum('bqk,bke->bqe', p, v[..., sl]))
        attn = jnp.concatenate(heads, axis=-1)
        attn = jnp.einsum('bqe,ed->bqd', attn, f32(kp['wo'][l])) + kp['bo'][l]
        x = _layer_norm(x + attn, kp['ln1w'][l], kp['ln1b'][l])
        h1 = jnp.maximum(jnp.einsum('bsd,df->bsf', x, f32(kp['ff1w'][l])) + kp['ff1b'][l], 0.0)
        ff = jnp.einsum('bsf,fd->bsd', h1, f32(kp['ff2w'][l])) + kp['ff2b'][l]
        x = _layer_norm(x + ff, kp['ln2w'][l], kp['ln2b'][l])
    return _layer_norm(x, kp['lnfw'], kp['lnfb'])


if __name__ == "__main__":
    B, S, D, H, FF, L = 2, 8, 32, 4, 64, 2
    key = jax.random.PRNGKey(0)
    k_x, k_p = jax.random.split(key)
    tgt = jax.random.normal(k_x, (B, S, D), dtype=jnp.float32)
    params = init_params(k_p, L, D, FF)
    kparams = prepare_params(params)

    out = transformer_decoder(tgt, kparams, nhead=H)
    out = jax.block_until_ready(out)

    ref = jax.block_until_ready(reference(tgt, kparams, nhead=H))
    assert out.shape == (B, S, D)
    assert bool(jnp.all(jnp.isfinite(out)))
    assert bool(jnp.allclose(out, ref, rtol=3e-2, atol=3e-2)), \
        f"max abs err {float(jnp.max(jnp.abs(out - ref)))}"
    print("KERNEL_OK")
</pallas_src>

<mosaic_0001>
module attributes {stable_mosaic.version = 11 : i64} {
  func.func @_decoder_kernel(%arg0: i32, %arg1: i32, %arg2: memref<2x8x32xf32, #tpu.memory_space<vmem>>, %arg3: memref<1x32x96xbf16, #tpu.memory_space<vmem>>, %arg4: memref<1x1x96xf32, #tpu.memory_space<vmem>>, %arg5: memref<1x32x32xbf16, #tpu.memory_space<vmem>>, %arg6: memref<1x1x32xf32, #tpu.memory_space<vmem>>, %arg7: memref<1x1x32xf32, #tpu.memory_space<vmem>>, %arg8: memref<1x1x32xf32, #tpu.memory_space<vmem>>, %arg9: memref<1x32x64xbf16, #tpu.memory_space<vmem>>, %arg10: memref<1x1x64xf32, #tpu.memory_space<vmem>>, %arg11: memref<1x64x32xbf16, #tpu.memory_space<vmem>>, %arg12: memref<1x1x32xf32, #tpu.memory_space<vmem>>, %arg13: memref<1x1x32xf32, #tpu.memory_space<vmem>>, %arg14: memref<1x1x32xf32, #tpu.memory_space<vmem>>, %arg15: memref<1x32xf32, #tpu.memory_space<vmem>>, %arg16: memref<1x32xf32, #tpu.memory_space<vmem>>, %arg17: memref<2x8x32xf32, #tpu.memory_space<vmem>>, %arg18: memref<16x32xf32, #tpu.memory_space<vmem>>, %arg19: memref<16x32xbf16, #tpu.memory_space<vmem>>) attributes {dimension_semantics = [#tpu.dimension_semantics<parallel>, #tpu.dimension_semantics<arbitrary>], iteration_bounds = array<i64: 1, 2>, scalar_prefetch = 0 : i64, scratch_operands = 2 : i64, tpu.core_type = #tpu.core_type<tc>, window_params = [{transform_indices = @transform_0, window_bounds = array<i64: 2, 8, 32>}, {transform_indices = @transform_1, window_bounds = array<i64: 1, 32, 96>}, {transform_indices = @transform_2, window_bounds = array<i64: 1, 1, 96>}, {transform_indices = @transform_3, window_bounds = array<i64: 1, 32, 32>}, {transform_indices = @transform_4, window_bounds = array<i64: 1, 1, 32>}, {transform_indices = @transform_5, window_bounds = array<i64: 1, 1, 32>}, {transform_indices = @transform_6, window_bounds = array<i64: 1, 1, 32>}, {transform_indices = @transform_7, window_bounds = array<i64: 1, 32, 64>}, {transform_indices = @transform_8, window_bounds = array<i64: 1, 1, 64>}, {transform_indices = @transform_9, window_bounds = array<i64: 1, 64, 32>}, {transform_indices = @transform_10, window_bounds = array<i64: 1, 1, 32>}, {transform_indices = @transform_11, window_bounds = array<i64: 1, 1, 32>}, {transform_indices = @transform_12, window_bounds = array<i64: 1, 1, 32>}, {pipeline_mode = #tpu.pipeline_mode<synchronous>, transform_indices = @transform_13, window_bounds = array<i64: 1, 32>}, {pipeline_mode = #tpu.pipeline_mode<synchronous>, transform_indices = @transform_14, window_bounds = array<i64: 1, 32>}, {transform_indices = @transform_15, window_bounds = array<i64: 2, 8, 32>}]} {
    %c0_i32 = arith.constant 0 : i32
    %0 = arith.cmpi eq, %arg1, %c0_i32 : i32
    %1 = arith.extui %0 : i1 to i32
    %c0_i32_0 = arith.constant 0 : i32
    %2 = arith.cmpi ne, %1, %c0_i32_0 : i32
    scf.if %2 {
      %c0_118 = arith.constant 0 : index
      %c0_119 = arith.constant 0 : index
      %c0_120 = arith.constant 0 : index
      %283 = vector.load %arg2[%c0_118, %c0_119, %c0_120] : memref<2x8x32xf32, #tpu.memory_space<vmem>>, vector<2x8x32xf32>
      %284 = vector.shape_cast %283 : vector<2x8x32xf32> to vector<16x32xf32>
      %c0_121 = arith.constant 0 : index
      %c0_122 = arith.constant 0 : index
      %285 = vector.load %arg18[%c0_121, %c0_122] : memref<16x32xf32, #tpu.memory_space<vmem>>, vector<16x32xf32>
      tpu.vector_store %arg18[%c0_121, %c0_122], %284 {strides = array<i32>} : memref<16x32xf32, #tpu.memory_space<vmem>>, vector<16x32xf32>,
    } else {
    }
    %c0 = arith.constant 0 : index
    %c0_1 = arith.constant 0 : index
    %3 = vector.load %arg18[%c0, %c0_1] : memref<16x32xf32, #tpu.memory_space<vmem>>, vector<16x32xf32>
    %4 = tpu.iota {dimensions = array<i32: 0>} : vector<8x8xi32>
    %5 = tpu.iota {dimensions = array<i32: 1>} : vector<8x8xi32>
    %6 = arith.cmpi sge, %4, %5 : vector<8x8xi32>
    %7 = arith.truncf %3 : vector<16x32xf32> to vector<16x32xbf16>
    %c0_2 = arith.constant 0 : index
    %c0_3 = arith.constant 0 : index
    %c0_4 = arith.constant 0 : index
    %8 = vector.load %arg3[%c0_2, %c0_3, %c0_4] : memref<1x32x96xbf16, #tpu.memory_space<vmem>>, vector<1x32x96xbf16>
    %9 = vector.shape_cast %8 : vector<1x32x96xbf16> to vector<32x96xbf16>
    %cst = arith.constant dense<0.000000e+00> : vector<16x96xf32>
    %10 = tpu.matmul %7, %9, %cst {dimension_numbers = #tpu.dot_dimension_numbers<[1], [0], [0], [1], [0, 0, 1, 1], [], []>} : vector<16x32xbf16>, vector<32x96xbf16>, vector<16x96xf32> -> vector<16x96xf32>
    %c0_5 = arith.constant 0 : index
    %c0_6 = arith.constant 0 : index
    %c0_7 = arith.constant 0 : index
    %11 = vector.load %arg4[%c0_5, %c0_6, %c0_7] : memref<1x1x96xf32, #tpu.memory_space<vmem>>, vector<1x1x96xf32>
    %12 = vector.shape_cast %11 : vector<1x1x96xf32> to vector<1x96xf32>
    %13 = vector.broadcast %12 : vector<1x96xf32> to vector<16x96xf32>
    %14 = arith.addf %10, %13 : vector<16x96xf32>
    %15 = vector.extract_strided_slice %14 {offsets = [0, 0], sizes = [16, 32], strides = [1, 1]} : vector<16x96xf32> to vector<16x32xf32>
    %16 = arith.truncf %15 : vector<16x32xf32> to vector<16x32xbf16>
    %17 = vector.extract_strided_slice %14 {offsets = [0, 32], sizes = [16, 32], strides = [1, 1]} : vector<16x96xf32> to vector<16x32xf32>
    %18 = arith.truncf %17 : vector<16x32xf32> to vector<16x32xbf16>
    %19 = vector.extract_strided_slice %14 {offsets = [0, 64], sizes = [16, 32], strides = [1, 1]} : vector<16x96xf32> to vector<16x32xf32>
    %20 = arith.truncf %19 : vector<16x32xf32> to vector<16x32xbf16>
    %21 = vector.extract_strided_slice %16 {offsets = [0, 0], sizes = [8, 32], strides = [1, 1]} : vector<16x32xbf16> to vector<8x32xbf16>
    %22 = vector.extract_strided_slice %18 {offsets = [0, 0], sizes = [8, 32], strides = [1, 1]} : vector<16x32xbf16> to vector<8x32xbf16>
    %23 = vector.extract_strided_slice %20 {offsets = [0, 0], sizes = [8, 32], strides = [1, 1]} : vector<16x32xbf16> to vector<8x32xbf16>
    %24 = vector.extract_strided_slice %21 {offsets = [0, 0], sizes = [8, 8], strides = [1, 1]} : vector<8x32xbf16> to vector<8x8xbf16>
    %25 = vector.extract_strided_slice %22 {offsets = [0, 0], sizes = [8, 8], strides = [1, 1]} : vector<8x32xbf16> to vector<8x8xbf16>
    %26 = vector.extract_strided_slice %23 {offsets = [0, 0], sizes = [8, 8], strides = [1, 1]} : vector<8x32xbf16> to vector<8x8xbf16>
    "tpu.trace_start"() <{level = 10 : i32, message = "qe,ke->qk"}> : () -> ()
    %cst_8 = arith.constant dense<0.000000e+00> : vector<8x8xf32>
    %27 = tpu.matmul %24, %25, %cst_8 {dimension_numbers = #tpu.dot_dimension_numbers<[1], [1], [0], [0], [0, 0, 1, 0], [], []>} : vector<8x8xbf16>, vector<8x8xbf16>, vector<8x8xf32> -> vector<8x8xf32>
    "tpu.trace_stop"() : () -> ()
    %cst_9 = arith.constant 0.353553385 : f32
    %28 = vector.broadcast %cst_9 : f32 to vector<8x8xf32>
    %29 = arith.mulf %27, %28 : vector<8x8xf32>
    %cst_10 = arith.constant -1.000000e+30 : f32
    %30 = vector.broadcast %cst_10 : f32 to vector<8x8xf32>
    %31 = arith.select %6, %29, %30 : vector<8x8xi1>, vector<8x8xf32>
    %cst_11 = arith.constant dense<0xFF800000> : vector<8xf32>
    %32 = vector.multi_reduction <maximumf>, %31, %cst_11 [1] : vector<8x8xf32> to vector<8xf32>
    %33 = vector.shape_cast %32 : vector<8xf32> to vector<8x1xf32>
    %34 = vector.broadcast %33 : vector<8x1xf32> to vector<8x8xf32>
    %35 = arith.subf %31, %34 : vector<8x8xf32>
    %36 = math.exp %35 : vector<8x8xf32>
    %cst_12 = arith.constant dense<0.000000e+00> : vector<8xf32>
    %37 = vector.multi_reduction <add>, %36, %cst_12 [1] : vector<8x8xf32> to vector<8xf32>
    %38 = vector.shape_cast %37 : vector<8xf32> to vector<8x1xf32>
    %39 = tpu.reciprocal %38 {approx = true} : vector<8x1xf32> -> vector<8x1xf32>
    %40 = vector.broadcast %39 : vector<8x1xf32> to vector<8x8xf32>
    %41 = arith.mulf %36, %40 : vector<8x8xf32>
    %42 = arith.truncf %41 : vector<8x8xf32> to vector<8x8xbf16>
    %cst_13 = arith.constant dense<0.000000e+00> : vector<8x8xf32>
    %43 = tpu.matmul %42, %26, %cst_13 {dimension_numbers = #tpu.dot_dimension_numbers<[1], [0], [0], [1], [0, 0, 1, 1], [], []>} : vector<8x8xbf16>, vector<8x8xbf16>, vector<8x8xf32> -> vector<8x8xf32>
    %44 = arith.truncf %43 : vector<8x8xf32> to vector<8x8xbf16>
    %c0_14 = arith.constant 0 : index
    %c0_15 = arith.constant 0 : index
    %45 = vector.load %arg19[%c0_14, %c0_15] : memref<16x32xbf16, #tpu.memory_space<vmem>>, vector<8x8xbf16>
    tpu.vector_store %arg19[%c0_14, %c0_15], %44 {strides = array<i32>} : memref<16x32xbf16, #tpu.memory_space<vmem>>, vector<8x8xbf16>,
    %46 = vector.extract_strided_slice %21 {offsets = [0, 8], sizes = [8, 8], strides = [1, 1]} : vector<8x32xbf16> to vector<8x8xbf16>
    %47 = vector.extract_strided_slice %22 {offsets = [0, 8], sizes = [8, 8], strides = [1, 1]} : vector<8x32xbf16> to vector<8x8xbf16>
    %48 = vector.extract_strided_slice %23 {offsets = [0, 8], sizes = [8, 8], strides = [1, 1]} : vector<8x32xbf16> to vector<8x8xbf16>
    "tpu.trace_start"() <{level = 10 : i32, message = "qe,ke->qk"}> : () -> ()
    %cst_16 = arith.constant dense<0.000000e+00> : vector<8x8xf32>
    %49 = tpu.matmul %46, %47, %cst_16 {dimension_numbers = #tpu.dot_dimension_numbers<[1], [1], [0], [0], [0, 0, 1, 0], [], []>} : vector<8x8xbf16>, vector<8x8xbf16>, vector<8x8xf32> -> vector<8x8xf32>
    "tpu.trace_stop"() : () -> ()
    %cst_17 = arith.constant 0.353553385 : f32
    %50 = vector.broadcast %cst_17 : f32 to vector<8x8xf32>
    %51 = arith.mulf %49, %50 : vector<8x8xf32>
    %cst_18 = arith.constant -1.000000e+30 : f32
    %52 = vector.broadcast %cst_18 : f32 to vector<8x8xf32>
    %53 = arith.select %6, %51, %52 : vector<8x8xi1>, vector<8x8xf32>
    %cst_19 = arith.constant dense<0xFF800000> : vector<8xf32>
    %54 = vector.multi_reduction <maximumf>, %53, %cst_19 [1] : vector<8x8xf32> to vector<8xf32>
    %55 = vector.shape_cast %54 : vector<8xf32> to vector<8x1xf32>
    %56 = vector.broadcast %55 : vector<8x1xf32> to vector<8x8xf32>
    %57 = arith.subf %53, %56 : vector<8x8xf32>
    %58 = math.exp %57 : vector<8x8xf32>
    %cst_20 = arith.constant dense<0.000000e+00> : vector<8xf32>
    %59 = vector.multi_reduction <add>, %58, %cst_20 [1] : vector<8x8xf32> to vector<8xf32>
    %60 = vector.shape_cast %59 : vector<8xf32> to vector<8x1xf32>
    %61 = tpu.reciprocal %60 {approx = true} : vector<8x1xf32> -> vector<8x1xf32>
    %62 = vector.broadcast %61 : vector<8x1xf32> to vector<8x8xf32>
    %63 = arith.mulf %58, %62 : vector<8x8xf32>
    %64 = arith.truncf %63 : vector<8x8xf32> to vector<8x8xbf16>
    %cst_21 = arith.constant dense<0.000000e+00> : vector<8x8xf32>
    %65 = tpu.matmul %64, %48, %cst_21 {dimension_numbers = #tpu.dot_dimension_numbers<[1], [0], [0], [1], [0, 0, 1, 1], [], []>} : vector<8x8xbf16>, vector<8x8xbf16>, vector<8x8xf32> -> vector<8x8xf32>
    %66 = arith.truncf %65 : vector<8x8xf32> to vector<8x8xbf16>
    %c0_22 = arith.constant 0 : index
    %c8 = arith.constant 8 : index
    %67 = vector.load %arg19[%c0_22, %c8] : memref<16x32xbf16, #tpu.memory_space<vmem>>, vector<8x8xbf16>
    tpu.vector_store %arg19[%c0_22, %c8], %66 {strides = array<i32>} : memref<16x32xbf16, #tpu.memory_space<vmem>>, vector<8x8xbf16>,
    %68 = vector.extract_strided_slice %21 {offsets = [0, 16], sizes = [8, 8], strides = [1, 1]} : vector<8x32xbf16> to vector<8x8xbf16>
    %69 = vector.extract_strided_slice %22 {offsets = [0, 16], sizes = [8, 8], strides = [1, 1]} : vector<8x32xbf16> to vector<8x8xbf16>
    %70 = vector.extract_strided_slice %23 {offsets = [0, 16], sizes = [8, 8], strides = [1, 1]} : vector<8x32xbf16> to vector<8x8xbf16>
    "tpu.trace_start"() <{level = 10 : i32, message = "qe,ke->qk"}> : () -> ()
    %cst_23 = arith.constant dense<0.000000e+00> : vector<8x8xf32>
    %71 = tpu.matmul %68, %69, %cst_23 {dimension_numbers = #tpu.dot_dimension_numbers<[1], [1], [0], [0], [0, 0, 1, 0], [], []>} : vector<8x8xbf16>, vector<8x8xbf16>, vector<8x8xf32> -> vector<8x8xf32>
    "tpu.trace_stop"() : () -> ()
    %cst_24 = arith.constant 0.353553385 : f32
    %72 = vector.broadcast %cst_24 : f32 to vector<8x8xf32>
    %73 = arith.mulf %71, %72 : vector<8x8xf32>
    %cst_25 = arith.constant -1.000000e+30 : f32
    %74 = vector.broadcast %cst_25 : f32 to vector<8x8xf32>
    %75 = arith.select %6, %73, %74 : vector<8x8xi1>, vector<8x8xf32>
    %cst_26 = arith.constant dense<0xFF800000> : vector<8xf32>
    %76 = vector.multi_reduction <maximumf>, %75, %cst_26 [1] : vector<8x8xf32> to vector<8xf32>
    %77 = vector.shape_cast %76 : vector<8xf32> to vector<8x1xf32>
    %78 = vector.broadcast %77 : vector<8x1xf32> to vector<8x8xf32>
    %79 = arith.subf %75, %78 : vector<8x8xf32>
    %80 = math.exp %79 : vector<8x8xf32>
    %cst_27 = arith.constant dense<0.000000e+00> : vector<8xf32>
    %81 = vector.multi_reduction <add>, %80, %cst_27 [1] : vector<8x8xf32> to vector<8xf32>
    %82 = vector.shape_cast %81 : vector<8xf32> to vector<8x1xf32>
    %83 = tpu.reciprocal %82 {approx = true} : vector<8x1xf32> -> vector<8x1xf32>
    %84 = vector.broadcast %83 : vector<8x1xf32> to vector<8x8xf32>
    %85 = arith.mulf %80, %84 : vector<8x8xf32>
    %86 = arith.truncf %85 : vector<8x8xf32> to vector<8x8xbf16>
    %cst_28 = arith.constant dense<0.000000e+00> : vector<8x8xf32>
    %87 = tpu.matmul %86, %70, %cst_28 {dimension_numbers = #tpu.dot_dimension_numbers<[1], [0], [0], [1], [0, 0, 1, 1], [], []>} : vector<8x8xbf16>, vector<8x8xbf16>, vector<8x8xf32> -> vector<8x8xf32>
    %88 = arith.truncf %87 : vector<8x8xf32> to vector<8x8xbf16>
    %c0_29 = arith.constant 0 : index
    %c16 = arith.constant 16 : index
    %89 = vector.load %arg19[%c0_29, %c16] : memref<16x32xbf16, #tpu.memory_space<vmem>>, vector<8x8xbf16>
    tpu.vector_store %arg19[%c0_29, %c16], %88 {strides = array<i32>} : memref<16x32xbf16, #tpu.memory_space<vmem>>, vector<8x8xbf16>,
    %90 = vector.extract_strided_slice %21 {offsets = [0, 24], sizes = [8, 8], strides = [1, 1]} : vector<8x32xbf16> to vector<8x8xbf16>
    %91 = vector.extract_strided_slice %22 {offsets = [0, 24], sizes = [8, 8], strides = [1, 1]} : vector<8x32xbf16> to vector<8x8xbf16>
    %92 = vector.extract_strided_slice %23 {offsets = [0, 24], sizes = [8, 8], strides = [1, 1]} : vector<8x32xbf16> to vector<8x8xbf16>
    "tpu.trace_start"() <{level = 10 : i32, message = "qe,ke->qk"}> : () -> ()
    %cst_30 = arith.constant dense<0.000000e+00> : vector<8x8xf32>
    %93 = tpu.matmul %90, %91, %cst_30 {dimension_numbers = #tpu.dot_dimension_numbers<[1], [1], [0], [0], [0, 0, 1, 0], [], []>} : vector<8x8xbf16>, vector<8x8xbf16>, vector<8x8xf32> -> vector<8x8xf32>
    "tpu.trace_stop"() : () -> ()
    %cst_31 = arith.constant 0.353553385 : f32
    %94 = vector.broadcast %cst_31 : f32 to vector<8x8xf32>
    %95 = arith.mulf %93, %94 : vector<8x8xf32>
    %cst_32 = arith.constant -1.000000e+30 : f32
    %96 = vector.broadcast %cst_32 : f32 to vector<8x8xf32>
    %97 = arith.select %6, %95, %96 : vector<8x8xi1>, vector<8x8xf32>
    %cst_33 = arith.constant dense<0xFF800000> : vector<8xf32>
    %98 = vector.multi_reduction <maximumf>, %97, %cst_33 [1] : vector<8x8xf32> to vector<8xf32>
    %99 = vector.shape_cast %98 : vector<8xf32> to vector<8x1xf32>
    %100 = vector.broadcast %99 : vector<8x1xf32> to vector<8x8xf32>
    %101 = arith.subf %97, %100 : vector<8x8xf32>
    %102 = math.exp %101 : vector<8x8xf32>
    %cst_34 = arith.constant dense<0.000000e+00> : vector<8xf32>
    %103 = vector.multi_reduction <add>, %102, %cst_34 [1] : vector<8x8xf32> to vector<8xf32>
    %104 = vector.shape_cast %103 : vector<8xf32> to vector<8x1xf32>
    %105 = tpu.reciprocal %104 {approx = true} : vector<8x1xf32> -> vector<8x1xf32>
    %106 = vector.broadcast %105 : vector<8x1xf32> to vector<8x8xf32>
    %107 = arith.mulf %102, %106 : vector<8x8xf32>
    %108 = arith.truncf %107 : vector<8x8xf32> to vector<8x8xbf16>
    %cst_35 = arith.constant dense<0.000000e+00> : vector<8x8xf32>
    %109 = tpu.matmul %108, %92, %cst_35 {dimension_numbers = #tpu.dot_dimension_numbers<[1], [0], [0], [1], [0, 0, 1, 1], [], []>} : vector<8x8xbf16>, vector<8x8xbf16>, vector<8x8xf32> -> vector<8x8xf32>
    %110 = arith.truncf %109 : vector<8x8xf32> to vector<8x8xbf16>
    %c0_36 = arith.constant 0 : index
    %c24 = arith.constant 24 : index
    %111 = vector.load %arg19[%c0_36, %c24] : memref<16x32xbf16, #tpu.memory_space<vmem>>, vector<8x8xbf16>
    tpu.vector_store %arg19[%c0_36, %c24], %110 {strides = array<i32>} : memref<16x32xbf16, #tpu.memory_space<vmem>>, vector<8x8xbf16>,
    %112 = vector.extract_strided_slice %16 {offsets = [8, 0], sizes = [8, 32], strides = [1, 1]} : vector<16x32xbf16> to vector<8x32xbf16>
    %113 = vector.extract_strided_slice %18 {offsets = [8, 0], sizes = [8, 32], strides = [1, 1]} : vector<16x32xbf16> to vector<8x32xbf16>
    %114 = vector.extract_strided_slice %20 {offsets = [8, 0], sizes = [8, 32], strides = [1, 1]} : vector<16x32xbf16> to vector<8x32xbf16>
    %115 = vector.extract_strided_slice %112 {offsets = [0, 0], sizes = [8, 8], strides = [1, 1]} : vector<8x32xbf16> to vector<8x8xbf16>
    %116 = vector.extract_strided_slice %113 {offsets = [0, 0], sizes = [8, 8], strides = [1, 1]} : vector<8x32xbf16> to vector<8x8xbf16>
    %117 = vector.extract_strided_slice %114 {offsets = [0, 0], sizes = [8, 8], strides = [1, 1]} : vector<8x32xbf16> to vector<8x8xbf16>
    "tpu.trace_start"() <{level = 10 : i32, message = "qe,ke->qk"}> : () -> ()
    %cst_37 = arith.constant dense<0.000000e+00> : vector<8x8xf32>
    %118 = tpu.matmul %115, %116, %cst_37 {dimension_numbers = #tpu.dot_dimension_numbers<[1], [1], [0], [0], [0, 0, 1, 0], [], []>} : vector<8x8xbf16>, vector<8x8xbf16>, vector<8x8xf32> -> vector<8x8xf32>
    "tpu.trace_stop"() : () -> ()
    %cst_38 = arith.constant 0.353553385 : f32
    %119 = vector.broadcast %cst_38 : f32 to vector<8x8xf32>
    %120 = arith.mulf %118, %119 : vector<8x8xf32>
    %cst_39 = arith.constant -1.000000e+30 : f32
    %121 = vector.broadcast %cst_39 : f32 to vector<8x8xf32>
    %122 = arith.select %6, %120, %121 : vector<8x8xi1>, vector<8x8xf32>
    %cst_40 = arith.constant dense<0xFF800000> : vector<8xf32>
    %123 = vector.multi_reduction <maximumf>, %122, %cst_40 [1] : vector<8x8xf32> to vector<8xf32>
    %124 = vector.shape_cast %123 : vector<8xf32> to vector<8x1xf32>
    %125 = vector.broadcast %124 : vector<8x1xf32> to vector<8x8xf32>
    %126 = arith.subf %122, %125 : vector<8x8xf32>
    %127 = math.exp %126 : vector<8x8xf32>
    %cst_41 = arith.constant dense<0.000000e+00> : vector<8xf32>
    %128 = vector.multi_reduction <add>, %127, %cst_41 [1] : vector<8x8xf32> to vector<8xf32>
    %129 = vector.shape_cast %128 : vector<8xf32> to vector<8x1xf32>
    %130 = tpu.reciprocal %129 {approx = true} : vector<8x1xf32> -> vector<8x1xf32>
    %131 = vector.broadcast %130 : vector<8x1xf32> to vector<8x8xf32>
    %132 = arith.mulf %127, %131 : vector<8x8xf32>
    %133 = arith.truncf %132 : vector<8x8xf32> to vector<8x8xbf16>
    %cst_42 = arith.constant dense<0.000000e+00> : vector<8x8xf32>
    %134 = tpu.matmul %133, %117, %cst_42 {dimension_numbers = #tpu.dot_dimension_numbers<[1], [0], [0], [1], [0, 0, 1, 1], [], []>} : vector<8x8xbf16>, vector<8x8xbf16>, vector<8x8xf32> -> vector<8x8xf32>
    %135 = arith.truncf %134 : vector<8x8xf32> to vector<8x8xbf16>
    %c8_43 = arith.constant 8 : index
    %c0_44 = arith.constant 0 : index
    %136 = vector.load %arg19[%c8_43, %c0_44] : memref<16x32xbf16, #tpu.memory_space<vmem>>, vector<8x8xbf16>
    tpu.vector_store %arg19[%c8_43, %c0_44], %135 {strides = array<i32>} : memref<16x32xbf16, #tpu.memory_space<vmem>>, vector<8x8xbf16>,
    %137 = vector.extract_strided_slice %112 {offsets = [0, 8], sizes = [8, 8], strides = [1, 1]} : vector<8x32xbf16> to vector<8x8xbf16>
    %138 = vector.extract_strided_slice %113 {offsets = [0, 8], sizes = [8, 8], strides = [1, 1]} : vector<8x32xbf16> to vector<8x8xbf16>
    %139 = vector.extract_strided_slice %114 {offsets = [0, 8], sizes = [8, 8], strides = [1, 1]} : vector<8x32xbf16> to vector<8x8xbf16>
    "tpu.trace_start"() <{level = 10 : i32, message = "qe,ke->qk"}> : () -> ()
    %cst_45 = arith.constant dense<0.000000e+00> : vector<8x8xf32>
    %140 = tpu.matmul %137, %138, %cst_45 {dimension_numbers = #tpu.dot_dimension_numbers<[1], [1], [0], [0], [0, 0, 1, 0], [], []>} : vector<8x8xbf16>, vector<8x8xbf16>, vector<8x8xf32> -> vector<8x8xf32>
    "tpu.trace_stop"() : () -> ()
    %cst_46 = arith.constant 0.353553385 : f32
    %141 = vector.broadcast %cst_46 : f32 to vector<8x8xf32>
    %142 = arith.mulf %140, %141 : vector<8x8xf32>
    %cst_47 = arith.constant -1.000000e+30 : f32
    %143 = vector.broadcast %cst_47 : f32 to vector<8x8xf32>
    %144 = arith.select %6, %142, %143 : vector<8x8xi1>, vector<8x8xf32>
    %cst_48 = arith.constant dense<0xFF800000> : vector<8xf32>
    %145 = vector.multi_reduction <maximumf>, %144, %cst_48 [1] : vector<8x8xf32> to vector<8xf32>
    %146 = vector.shape_cast %145 : vector<8xf32> to vector<8x1xf32>
    %147 = vector.broadcast %146 : vector<8x1xf32> to vector<8x8xf32>
    %148 = arith.subf %144, %147 : vector<8x8xf32>
    %149 = math.exp %148 : vector<8x8xf32>
    %cst_49 = arith.constant dense<0.000000e+00> : vector<8xf32>
    %150 = vector.multi_reduction <add>, %149, %cst_49 [1] : vector<8x8xf32> to vector<8xf32>
    %151 = vector.shape_cast %150 : vector<8xf32> to vector<8x1xf32>
    %152 = tpu.reciprocal %151 {approx = true} : vector<8x1xf32> -> vector<8x1xf32>
    %153 = vector.broadcast %152 : vector<8x1xf32> to vector<8x8xf32>
    %154 = arith.mulf %149, %153 : vector<8x8xf32>
    %155 = arith.truncf %154 : vector<8x8xf32> to vector<8x8xbf16>
    %cst_50 = arith.constant dense<0.000000e+00> : vector<8x8xf32>
    %156 = tpu.matmul %155, %139, %cst_50 {dimension_numbers = #tpu.dot_dimension_numbers<[1], [0], [0], [1], [0, 0, 1, 1], [], []>} : vector<8x8xbf16>, vector<8x8xbf16>, vector<8x8xf32> -> vector<8x8xf32>
    %157 = arith.truncf %156 : vector<8x8xf32> to vector<8x8xbf16>
    %c8_51 = arith.constant 8 : index
    %c8_52 = arith.constant 8 : index
    %158 = vector.load %arg19[%c8_51, %c8_52] : memref<16x32xbf16, #tpu.memory_space<vmem>>, vector<8x8xbf16>
    tpu.vector_store %arg19[%c8_51, %c8_52], %157 {strides = array<i32>} : memref<16x32xbf16, #tpu.memory_space<vmem>>, vector<8x8xbf16>,
    %159 = vector.extract_strided_slice %112 {offsets = [0, 16], sizes = [8, 8], strides = [1, 1]} : vector<8x32xbf16> to vector<8x8xbf16>
    %160 = vector.extract_strided_slice %113 {offsets = [0, 16], sizes = [8, 8], strides = [1, 1]} : vector<8x32xbf16> to vector<8x8xbf16>
    %161 = vector.extract_strided_slice %114 {offsets = [0, 16], sizes = [8, 8], strides = [1, 1]} : vector<8x32xbf16> to vector<8x8xbf16>
    "tpu.trace_start"() <{level = 10 : i32, message = "qe,ke->qk"}> : () -> ()
    %cst_53 = arith.constant dense<0.000000e+00> : vector<8x8xf32>
    %162 = tpu.matmul %159, %160, %cst_53 {dimension_numbers = #tpu.dot_dimension_numbers<[1], [1], [0], [0], [0, 0, 1, 0], [], []>} : vector<8x8xbf16>, vector<8x8xbf16>, vector<8x8xf32> -> vector<8x8xf32>
    "tpu.trace_stop"() : () -> ()
    %cst_54 = arith.constant 0.353553385 : f32
    %163 = vector.broadcast %cst_54 : f32 to vector<8x8xf32>
    %164 = arith.mulf %162, %163 : vector<8x8xf32>
    %cst_55 = arith.constant -1.000000e+30 : f32
    %165 = vector.broadcast %cst_55 : f32 to vector<8x8xf32>
    %166 = arith.select %6, %164, %165 : vector<8x8xi1>, vector<8x8xf32>
    %cst_56 = arith.constant dense<0xFF800000> : vector<8xf32>
    %167 = vector.multi_reduction <maximumf>, %166, %cst_56 [1] : vector<8x8xf32> to vector<8xf32>
    %168 = vector.shape_cast %167 : vector<8xf32> to vector<8x1xf32>
    %169 = vector.broadcast %168 : vector<8x1xf32> to vector<8x8xf32>
    %170 = arith.subf %166, %169 : vector<8x8xf32>
    %171 = math.exp %170 : vector<8x8xf32>
    %cst_57 = arith.constant dense<0.000000e+00> : vector<8xf32>
    %172 = vector.multi_reduction <add>, %171, %cst_57 [1] : vector<8x8xf32> to vector<8xf32>
    %173 = vector.shape_cast %172 : vector<8xf32> to vector<8x1xf32>
    %174 = tpu.reciprocal %173 {approx = true} : vector<8x1xf32> -> vector<8x1xf32>
    %175 = vector.broadcast %174 : vector<8x1xf32> to vector<8x8xf32>
    %176 = arith.mulf %171, %175 : vector<8x8xf32>
    %177 = arith.truncf %176 : vector<8x8xf32> to vector<8x8xbf16>
    %cst_58 = arith.constant dense<0.000000e+00> : vector<8x8xf32>
    %178 = tpu.matmul %177, %161, %cst_58 {dimension_numbers = #tpu.dot_dimension_numbers<[1], [0], [0], [1], [0, 0, 1, 1], [], []>} : vector<8x8xbf16>, vector<8x8xbf16>, vector<8x8xf32> -> vector<8x8xf32>
    %179 = arith.truncf %178 : vector<8x8xf32> to vector<8x8xbf16>
    %c8_59 = arith.constant 8 : index
    %c16_60 = arith.constant 16 : index
    %180 = vector.load %arg19[%c8_59, %c16_60] : memref<16x32xbf16, #tpu.memory_space<vmem>>, vector<8x8xbf16>
    tpu.vector_store %arg19[%c8_59, %c16_60], %179 {strides = array<i32>} : memref<16x32xbf16, #tpu.memory_space<vmem>>, vector<8x8xbf16>,
    %181 = vector.extract_strided_slice %112 {offsets = [0, 24], sizes = [8, 8], strides = [1, 1]} : vector<8x32xbf16> to vector<8x8xbf16>
    %182 = vector.extract_strided_slice %113 {offsets = [0, 24], sizes = [8, 8], strides = [1, 1]} : vector<8x32xbf16> to vector<8x8xbf16>
    %183 = vector.extract_strided_slice %114 {offsets = [0, 24], sizes = [8, 8], strides = [1, 1]} : vector<8x32xbf16> to vector<8x8xbf16>
    "tpu.trace_start"() <{level = 10 : i32, message = "qe,ke->qk"}> : () -> ()
    %cst_61 = arith.constant dense<0.000000e+00> : vector<8x8xf32>
    %184 = tpu.matmul %181, %182, %cst_61 {dimension_numbers = #tpu.dot_dimension_numbers<[1], [1], [0], [0], [0, 0, 1, 0], [], []>} : vector<8x8xbf16>, vector<8x8xbf16>, vector<8x8xf32> -> vector<8x8xf32>
    "tpu.trace_stop"() : () -> ()
    %cst_62 = arith.constant 0.353553385 : f32
    %185 = vector.broadcast %cst_62 : f32 to vector<8x8xf32>
    %186 = arith.mulf %184, %185 : vector<8x8xf32>
    %cst_63 = arith.constant -1.000000e+30 : f32
    %187 = vector.broadcast %cst_63 : f32 to vector<8x8xf32>
    %188 = arith.select %6, %186, %187 : vector<8x8xi1>, vector<8x8xf32>
    %cst_64 = arith.constant dense<0xFF800000> : vector<8xf32>
    %189 = vector.multi_reduction <maximumf>, %188, %cst_64 [1] : vector<8x8xf32> to vector<8xf32>
    %190 = vector.shape_cast %189 : vector<8xf32> to vector<8x1xf32>
    %191 = vector.broadcast %190 : vector<8x1xf32> to vector<8x8xf32>
    %192 = arith.subf %188, %191 : vector<8x8xf32>
    %193 = math.exp %192 : vector<8x8xf32>
    %cst_65 = arith.constant dense<0.000000e+00> : vector<8xf32>
    %194 = vector.multi_reduction <add>, %193, %cst_65 [1] : vector<8x8xf32> to vector<8xf32>
    %195 = vector.shape_cast %194 : vector<8xf32> to vector<8x1xf32>
    %196 = tpu.reciprocal %195 {approx = true} : vector<8x1xf32> -> vector<8x1xf32>
    %197 = vector.broadcast %196 : vector<8x1xf32> to vector<8x8xf32>
    %198 = arith.mulf %193, %197 : vector<8x8xf32>
    %199 = arith.truncf %198 : vector<8x8xf32> to vector<8x8xbf16>
    %cst_66 = arith.constant dense<0.000000e+00> : vector<8x8xf32>
    %200 = tpu.matmul %199, %183, %cst_66 {dimension_numbers = #tpu.dot_dimension_numbers<[1], [0], [0], [1], [0, 0, 1, 1], [], []>} : vector<8x8xbf16>, vector<8x8xbf16>, vector<8x8xf32> -> vector<8x8xf32>
    %201 = arith.truncf %200 : vector<8x8xf32> to vector<8x8xbf16>
    %c8_67 = arith.constant 8 : index
    %c24_68 = arith.constant 24 : index
    %202 = vector.load %arg19[%c8_67, %c24_68] : memref<16x32xbf16, #tpu.memory_space<vmem>>, vector<8x8xbf16>
    tpu.vector_store %arg19[%c8_67, %c24_68], %201 {strides = array<i32>} : memref<16x32xbf16, #tpu.memory_space<vmem>>, vector<8x8xbf16>,
    %c0_69 = arith.constant 0 : index
    %c0_70 = arith.constant 0 : index
    %203 = vector.load %arg19[%c0_69, %c0_70] : memref<16x32xbf16, #tpu.memory_space<vmem>>, vector<16x32xbf16>
    %c0_71 = arith.constant 0 : index
    %c0_72 = arith.constant 0 : index
    %c0_73 = arith.constant 0 : index
    %204 = vector.load %arg5[%c0_71, %c0_72, %c0_73] : memref<1x32x32xbf16, #tpu.memory_space<vmem>>, vector<1x32x32xbf16>
    %205 = vector.shape_cast %204 : vector<1x32x32xbf16> to vector<32x32xbf16>
    %cst_74 = arith.constant dense<0.000000e+00> : vector<16x32xf32>
    %206 = tpu.matmul %203, %205, %cst_74 {dimension_numbers = #tpu.dot_dimension_numbers<[1], [0], [0], [1], [0, 0, 1, 1], [], []>} : vector<16x32xbf16>, vector<32x32xbf16>, vector<16x32xf32> -> vector<16x32xf32>
    %c0_75 = arith.constant 0 : index
    %c0_76 = arith.constant 0 : index
    %c0_77 = arith.constant 0 : index
    %207 = vector.load %arg6[%c0_75, %c0_76, %c0_77] : memref<1x1x32xf32, #tpu.memory_space<vmem>>, vector<1x1x32xf32>
    %208 = vector.shape_cast %207 : vector<1x1x32xf32> to vector<1x32xf32>
    %209 = vector.broadcast %208 : vector<1x32xf32> to vector<16x32xf32>
    %210 = arith.addf %206, %209 : vector<16x32xf32>
    %211 = arith.addf %3, %210 : vector<16x32xf32>
    %c0_78 = arith.constant 0 : index
    %c0_79 = arith.constant 0 : index
    %c0_80 = arith.constant 0 : index
    %212 = vector.load %arg7[%c0_78, %c0_79, %c0_80] : memref<1x1x32xf32, #tpu.memory_space<vmem>>, vector<1x1x32xf32>
    %213 = vector.shape_cast %212 : vector<1x1x32xf32> to vector<1x32xf32>
    %c0_81 = arith.constant 0 : index
    %c0_82 = arith.constant 0 : index
    %c0_83 = arith.constant 0 : index
    %214 = vector.load %arg8[%c0_81, %c0_82, %c0_83] : memref<1x1x32xf32, #tpu.memory_space<vmem>>, vector<1x1x32xf32>
    %215 = vector.shape_cast %214 : vector<1x1x32xf32> to vector<1x32xf32>
    %cst_84 = arith.constant dense<0.000000e+00> : vector<16xf32>
    %216 = vector.multi_reduction <add>, %211, %cst_84 [1] : vector<16x32xf32> to vector<16xf32>
    %217 = vector.shape_cast %216 : vector<16xf32> to vector<16x1xf32>
    %cst_85 = arith.constant 3.200000e+01 : f32
    %218 = vector.broadcast %cst_85 : f32 to vector<16x1xf32>
    %219 = arith.divf %217, %218 : vector<16x1xf32>
    %220 = vector.broadcast %219 : vector<16x1xf32> to vector<16x32xf32>
    %221 = arith.subf %211, %220 : vector<16x32xf32>
    %222 = arith.mulf %221, %221 : vector<16x32xf32>
    %cst_86 = arith.constant dense<0.000000e+00> : vector<16xf32>
    %223 = vector.multi_reduction <add>, %222, %cst_86 [1] : vector<16x32xf32> to vector<16xf32>
    %224 = vector.shape_cast %223 : vector<16xf32> to vector<16x1xf32>
    %cst_87 = arith.constant 3.200000e+01 : f32
    %225 = vector.broadcast %cst_87 : f32 to vector<16x1xf32>
    %226 = arith.divf %224, %225 : vector<16x1xf32>
    %cst_88 = arith.constant 9.99999974E-6 : f32
    %227 = vector.broadcast %cst_88 : f32 to vector<16x1xf32>
    %228 = arith.addf %226, %227 : vector<16x1xf32>
    %229 = math.rsqrt %228 : vector<16x1xf32>
    %230 = vector.broadcast %229 : vector<16x1xf32> to vector<16x32xf32>
    %231 = arith.mulf %221, %230 : vector<16x32xf32>
    %232 = vector.broadcast %213 : vector<1x32xf32> to vector<16x32xf32>
    %233 = arith.mulf %231, %232 : vector<16x32xf32>
    %234 = vector.broadcast %215 : vector<1x32xf32> to vector<16x32xf32>
    %235 = arith.addf %233, %234 : vector<16x32xf32>
    %236 = arith.truncf %235 : vector<16x32xf32> to vector<16x32xbf16>
    %c0_89 = arith.constant 0 : index
    %c0_90 = arith.constant 0 : index
    %c0_91 = arith.constant 0 : index
    %237 = vector.load %arg9[%c0_89, %c0_90, %c0_91] : memref<1x32x64xbf16, #tpu.memory_space<vmem>>, vector<1x32x64xbf16>
    %238 = vector.shape_cast %237 : vector<1x32x64xbf16> to vector<32x64xbf16>
    %cst_92 = arith.constant dense<0.000000e+00> : vector<16x64xf32>
    %239 = tpu.matmul %236, %238, %cst_92 {dimension_numbers = #tpu.dot_dimension_numbers<[1], [0], [0], [1], [0, 0, 1, 1], [], []>} : vector<16x32xbf16>, vector<32x64xbf16>, vector<16x64xf32> -> vector<16x64xf32>
    %c0_93 = arith.constant 0 : index
    %c0_94 = arith.constant 0 : index
    %c0_95 = arith.constant 0 : index
    %240 = vector.load %arg10[%c0_93, %c0_94, %c0_95] : memref<1x1x64xf32, #tpu.memory_space<vmem>>, vector<1x1x64xf32>
    %241 = vector.shape_cast %240 : vector<1x1x64xf32> to vector<1x64xf32>
    %242 = vector.broadcast %241 : vector<1x64xf32> to vector<16x64xf32>
    %243 = arith.addf %239, %242 : vector<16x64xf32>
    %cst_96 = arith.constant 0.000000e+00 : f32
    %244 = vector.broadcast %cst_96 : f32 to vector<16x64xf32>
    %245 = arith.maximumf %243, %244 : vector<16x64xf32>
    %246 = arith.truncf %245 : vector<16x64xf32> to vector<16x64xbf16>
    %c0_97 = arith.constant 0 : index
    %c0_98 = arith.constant 0 : index
    %c0_99 = arith.constant 0 : index
    %247 = vector.load %arg11[%c0_97, %c0_98, %c0_99] : memref<1x64x32xbf16, #tpu.memory_space<vmem>>, vector<1x64x32xbf16>
    %248 = vector.shape_cast %247 : vector<1x64x32xbf16> to vector<64x32xbf16>
    %cst_100 = arith.constant dense<0.000000e+00> : vector<16x32xf32>
    %249 = tpu.matmul %246, %248, %cst_100 {dimension_numbers = #tpu.dot_dimension_numbers<[1], [0], [0], [1], [0, 0, 1, 1], [], []>} : vector<16x64xbf16>, vector<64x32xbf16>, vector<16x32xf32> -> vector<16x32xf32>
    %c0_101 = arith.constant 0 : index
    %c0_102 = arith.constant 0 : index
    %c0_103 = arith.constant 0 : index
    %250 = vector.load %arg12[%c0_101, %c0_102, %c0_103] : memref<1x1x32xf32, #tpu.memory_space<vmem>>, vector<1x1x32xf32>
    %251 = vector.shape_cast %250 : vector<1x1x32xf32> to vector<1x32xf32>
    %252 = vector.broadcast %251 : vector<1x32xf32> to vector<16x32xf32>
    %253 = arith.addf %249, %252 : vector<16x32xf32>
    %254 = arith.addf %235, %253 : vector<16x32xf32>
    %c0_104 = arith.constant 0 : index
    %c0_105 = arith.constant 0 : index
    %c0_106 = arith.constant 0 : index
    %255 = vector.load %arg13[%c0_104, %c0_105, %c0_106] : memref<1x1x32xf32, #tpu.memory_space<vmem>>, vector<1x1x32xf32>
    %256 = vector.shape_cast %255 : vector<1x1x32xf32> to vector<1x32xf32>
    %c0_107 = arith.constant 0 : index
    %c0_108 = arith.constant 0 : index
    %c0_109 = arith.constant 0 : index
    %257 = vector.load %arg14[%c0_107, %c0_108, %c0_109] : memref<1x1x32xf32, #tpu.memory_space<vmem>>, vector<1x1x32xf32>
    %258 = vector.shape_cast %257 : vector<1x1x32xf32> to vector<1x32xf32>
    %cst_110 = arith.constant dense<0.000000e+00> : vector<16xf32>
    %259 = vector.multi_reduction <add>, %254, %cst_110 [1] : vector<16x32xf32> to vector<16xf32>
    %260 = vector.shape_cast %259 : vector<16xf32> to vector<16x1xf32>
    %cst_111 = arith.constant 3.200000e+01 : f32
    %261 = vector.broadcast %cst_111 : f32 to vector<16x1xf32>
    %262 = arith.divf %260, %261 : vector<16x1xf32>
    %263 = vector.broadcast %262 : vector<16x1xf32> to vector<16x32xf32>
    %264 = arith.subf %254, %263 : vector<16x32xf32>
    %265 = arith.mulf %264, %264 : vector<16x32xf32>
    %cst_112 = arith.constant dense<0.000000e+00> : vector<16xf32>
    %266 = vector.multi_reduction <add>, %265, %cst_112 [1] : vector<16x32xf32> to vector<16xf32>
    %267 = vector.shape_cast %266 : vector<16xf32> to vector<16x1xf32>
    %cst_113 = arith.constant 3.200000e+01 : f32
    %268 = vector.broadcast %cst_113 : f32 to vector<16x1xf32>
    %269 = arith.divf %267, %268 : vector<16x1xf32>
    %cst_114 = arith.constant 9.99999974E-6 : f32
    %270 = vector.broadcast %cst_114 : f32 to vector<16x1xf32>
    %271 = arith.addf %269, %270 : vector<16x1xf32>
    %272 = math.rsqrt %271 : vector<16x1xf32>
    %273 = vector.broadcast %272 : vector<16x1xf32> to vector<16x32xf32>
    %274 = arith.mulf %264, %273 : vector<16x32xf32>
    %275 = vector.broadcast %256 : vector<1x32xf32> to vector<16x32xf32>
    %276 = arith.mulf %274, %275 : vector<16x32xf32>
    %277 = vector.broadcast %258 : vector<1x32xf32> to vector<16x32xf32>
    %278 = arith.addf %276, %277 : vector<16x32xf32>
    %c0_115 = arith.constant 0 : index
    %c0_116 = arith.constant 0 : index
    %279 = vector.load %arg18[%c0_115, %c0_116] : memref<16x32xf32, #tpu.memory_space<vmem>>, vector<16x32xf32>
    tpu.vector_store %arg18[%c0_115, %c0_116], %278 {strides = array<i32>} : memref<16x32xf32, #tpu.memory_space<vmem>>, vector<16x32xf32>,
    %c1_i32 = arith.constant 1 : i32
    %280 = arith.cmpi eq, %arg1, %c1_i32 : i32
    %281 = arith.extui %280 : i1 to i32
    %c0_i32_117 = arith.constant 0 : i32
    %282 = arith.cmpi ne, %281, %c0_i32_117 : i32
    scf.if %282 {
      %c0_118 = arith.constant 0 : index
      %c0_119 = arith.constant 0 : index
      %283 = vector.load %arg15[%c0_118, %c0_119] : memref<1x32xf32, #tpu.memory_space<vmem>>, vector<1x32xf32>
      %c0_120 = arith.constant 0 : index
      %c0_121 = arith.constant 0 : index
      %284 = vector.load %arg16[%c0_120, %c0_121] : memref<1x32xf32, #tpu.memory_space<vmem>>, vector<1x32xf32>
      %cst_122 = arith.constant dense<0.000000e+00> : vector<16xf32>
      %285 = vector.multi_reduction <add>, %278, %cst_122 [1] : vector<16x32xf32> to vector<16xf32>
      %286 = vector.shape_cast %285 : vector<16xf32> to vector<16x1xf32>
      %cst_123 = arith.constant 3.200000e+01 : f32
      %287 = vector.broadcast %cst_123 : f32 to vector<16x1xf32>
      %288 = arith.divf %286, %287 : vector<16x1xf32>
      %289 = vector.broadcast %288 : vector<16x1xf32> to vector<16x32xf32>
      %290 = arith.subf %278, %289 : vector<16x32xf32>
      %291 = arith.mulf %290, %290 : vector<16x32xf32>
      %cst_124 = arith.constant dense<0.000000e+00> : vector<16xf32>
      %292 = vector.multi_reduction <add>, %291, %cst_124 [1] : vector<16x32xf32> to vector<16xf32>
      %293 = vector.shape_cast %292 : vector<16xf32> to vector<16x1xf32>
      %cst_125 = arith.constant 3.200000e+01 : f32
      %294 = vector.broadcast %cst_125 : f32 to vector<16x1xf32>
      %295 = arith.divf %293, %294 : vector<16x1xf32>
      %cst_126 = arith.constant 9.99999974E-6 : f32
      %296 = vector.broadcast %cst_126 : f32 to vector<16x1xf32>
      %297 = arith.addf %295, %296 : vector<16x1xf32>
      %298 = math.rsqrt %297 : vector<16x1xf32>
      %299 = vector.broadcast %298 : vector<16x1xf32> to vector<16x32xf32>
      %300 = arith.mulf %290, %299 : vector<16x32xf32>
      %301 = vector.broadcast %283 : vector<1x32xf32> to vector<16x32xf32>
      %302 = arith.mulf %300, %301 : vector<16x32xf32>
      %303 = vector.broadcast %284 : vector<1x32xf32> to vector<16x32xf32>
      %304 = arith.addf %302, %303 : vector<16x32xf32>
      %305 = vector.shape_cast %304 : vector<16x32xf32> to vector<2x8x32xf32>
      %c0_127 = arith.constant 0 : index
      %c0_128 = arith.constant 0 : index
      %c0_129 = arith.constant 0 : index
      %306 = vector.load %arg17[%c0_127, %c0_128, %c0_129] : memref<2x8x32xf32, #tpu.memory_space<vmem>>, vector<2x8x32xf32>
      tpu.vector_store %arg17[%c0_127, %c0_128, %c0_129], %305 {strides = array<i32>} : memref<2x8x32xf32, #tpu.memory_space<vmem>>, vector<2x8x32xf32>,
    } else {
    }
    return
  }
  func.func @transform_0(%arg0: i32, %arg1: i32) -> (i32, i32, i32) {
    %c0_i32 = arith.constant 0 : i32
    %c0_i32_0 = arith.constant 0 : i32
    %c0_i32_1 = arith.constant 0 : i32
    return %arg0, %c0_i32, %c0_i32_0 : i32, i32, i32
  }
  func.func @transform_1(%arg0: i32, %arg1: i32) -> (i32, i32, i32) {
    %c0_i32 = arith.constant 0 : i32
    %c0_i32_0 = arith.constant 0 : i32
    %c0_i32_1 = arith.constant 0 : i32
    return %arg1, %c0_i32, %c0_i32_0 : i32, i32, i32
  }
  func.func @transform_2(%arg0: i32, %arg1: i32) -> (i32, i32, i32) {
    %c0_i32 = arith.constant 0 : i32
    %c0_i32_0 = arith.constant 0 : i32
    %c0_i32_1 = arith.constant 0 : i32
    return %arg1, %c0_i32, %c0_i32_0 : i32, i32, i32
  }
  func.func @transform_3(%arg0: i32, %arg1: i32) -> (i32, i32, i32) {
    %c0_i32 = arith.constant 0 : i32
    %c0_i32_0 = arith.constant 0 : i32
    %c0_i32_1 = arith.constant 0 : i32
    return %arg1, %c0_i32, %c0_i32_0 : i32, i32, i32
  }
  func.func @transform_4(%arg0: i32, %arg1: i32) -> (i32, i32, i32) {
    %c0_i32 = arith.constant 0 : i32
    %c0_i32_0 = arith.constant 0 : i32
    %c0_i32_1 = arith.constant 0 : i32
    return %arg1, %c0_i32, %c0_i32_0 : i32, i32, i32
  }
  func.func @transform_5(%arg0: i32, %arg1: i32) -> (i32, i32, i32) {
    %c0_i32 = arith.constant 0 : i32
    %c0_i32_0 = arith.constant 0 : i32
    %c0_i32_1 = arith.constant 0 : i32
    return %arg1, %c0_i32, %c0_i32_0 : i32, i32, i32
  }
  func.func @transform_6(%arg0: i32, %arg1: i32) -> (i32, i32, i32) {
    %c0_i32 = arith.constant 0 : i32
    %c0_i32_0 = arith.constant 0 : i32
    %c0_i32_1 = arith.constant 0 : i32
    return %arg1, %c0_i32, %c0_i32_0 : i32, i32, i32
  }
  func.func @transform_7(%arg0: i32, %arg1: i32) -> (i32, i32, i32) {
    %c0_i32 = arith.constant 0 : i32
    %c0_i32_0 = arith.constant 0 : i32
    %c0_i32_1 = arith.constant 0 : i32
    return %arg1, %c0_i32, %c0_i32_0 : i32, i32, i32
  }
  func.func @transform_8(%arg0: i32, %arg1: i32) -> (i32, i32, i32) {
    %c0_i32 = arith.constant 0 : i32
    %c0_i32_0 = arith.constant 0 : i32
    %c0_i32_1 = arith.constant 0 : i32
    return %arg1, %c0_i32, %c0_i32_0 : i32, i32, i32
  }
  func.func @transform_9(%arg0: i32, %arg1: i32) -> (i32, i32, i32) {
    %c0_i32 = arith.constant 0 : i32
    %c0_i32_0 = arith.constant 0 : i32
    %c0_i32_1 = arith.constant 0 : i32
    return %arg1, %c0_i32, %c0_i32_0 : i32, i32, i32
  }
  func.func @transform_10(%arg0: i32, %arg1: i32) -> (i32, i32, i32) {
    %c0_i32 = arith.constant 0 : i32
    %c0_i32_0 = arith.constant 0 : i32
    %c0_i32_1 = arith.constant 0 : i32
    return %arg1, %c0_i32, %c0_i32_0 : i32, i32, i32
  }
  func.func @transform_11(%arg0: i32, %arg1: i32) -> (i32, i32, i32) {
    %c0_i32 = arith.constant 0 : i32
    %c0_i32_0 = arith.constant 0 : i32
    %c0_i32_1 = arith.constant 0 : i32
    return %arg1, %c0_i32, %c0_i32_0 : i32, i32, i32
  }
  func.func @transform_12(%arg0: i32, %arg1: i32) -> (i32, i32, i32) {
    %c0_i32 = arith.constant 0 : i32
    %c0_i32_0 = arith.constant 0 : i32
    %c0_i32_1 = arith.constant 0 : i32
    return %arg1, %c0_i32, %c0_i32_0 : i32, i32, i32
  }
  func.func @transform_13(%arg0: i32, %arg1: i32) -> (i32, i32) {
    %c0_i32 = arith.constant 0 : i32
    %c0_i32_0 = arith.constant 0 : i32
    %c0_i32_1 = arith.constant 0 : i32
    return %c0_i32, %c0_i32_0 : i32, i32
  }
  func.func @transform_14(%arg0: i32, %arg1: i32) -> (i32, i32) {
    %c0_i32 = arith.constant 0 : i32
    %c0_i32_0 = arith.constant 0 : i32
    %c0_i32_1 = arith.constant 0 : i32
    return %c0_i32, %c0_i32_0 : i32, i32
  }
  func.func @transform_15(%arg0: i32, %arg1: i32) -> (i32, i32, i32) {
    %c0_i32 = arith.constant 0 : i32
    %c0_i32_0 = arith.constant 0 : i32
    %c0_i32_1 = arith.constant 0 : i32
    return %arg0, %c0_i32, %c0_i32_0 : i32, i32, i32
  }
}

</mosaic_0001>

<llo_original>
// kernel: tpu_custom_call.1
$region0: #{tpu_custom_call.1}
  #allocation0 [shape = 'u32[]', space=smem, size = 0x4, offset = 0x4, fixed_abs, tag = 'smem constant byte address 0x4 - core index']
  #allocation1 [shape = 'u32[144,128]{1,0:T(1,128)}', space=vmem, size = 0x12000, scoped, tag = 'internal scratch']
  #allocation2 [shape = 'f32[16,32]{1,0:T(8,128)}', space=vmem, size = 0x2000, scoped, tag = 'scratch operand']
  #allocation3 [shape = 'bf16[16,32]{1,0:T(8,128)(2,1)}', space=vmem, size = 0x1000, scoped, tag = 'scratch operand']
  %s0 = inlined_call_operand.hbm [shape: f32[2,8,32], index: 0, kind: input, shape index: {}]
  %s1 = inlined_call_operand.vmem [shape: bf16[2,32,96], index: 1, kind: input, shape index: {}]
  %s2 = inlined_call_operand.vmem [shape: f32[2,1,96], index: 2, kind: input, shape index: {}]
  %s3 = inlined_call_operand.vmem [shape: bf16[2,32,32], index: 3, kind: input, shape index: {}]
  %s4 = inlined_call_operand.vmem [shape: f32[2,1,32], index: 4, kind: input, shape index: {}]
  %s5 = inlined_call_operand.vmem [shape: f32[2,1,32], index: 5, kind: input, shape index: {}]
  %s6 = inlined_call_operand.vmem [shape: f32[2,1,32], index: 6, kind: input, shape index: {}]
  %s7 = inlined_call_operand.vmem [shape: bf16[2,32,64], index: 7, kind: input, shape index: {}]
  %s8 = inlined_call_operand.vmem [shape: f32[2,1,64], index: 8, kind: input, shape index: {}]
  %s9 = inlined_call_operand.vmem [shape: bf16[2,64,32], index: 9, kind: input, shape index: {}]
  %s10 = inlined_call_operand.vmem [shape: f32[2,1,32], index: 10, kind: input, shape index: {}]
  %s11 = inlined_call_operand.vmem [shape: f32[2,1,32], index: 11, kind: input, shape index: {}]
  %s12 = inlined_call_operand.vmem [shape: f32[2,1,32], index: 12, kind: input, shape index: {}]
  %s13 = inlined_call_operand.vmem [shape: f32[1,32], index: 13, kind: input, shape index: {}]
  %s14 = inlined_call_operand.vmem [shape: f32[1,32], index: 14, kind: input, shape index: {}]
  %s15 = inlined_call_operand.hbm [shape: f32[2,8,32], index: 15, kind: output, shape index: {}]
  %s16 = sld [smem:[#allocation0]]
  $region105: #{tpu_custom_call.1} parent=0
    _
  %s18 = ssub.s32 1, %s16
  %s19 = scalar_select 0, %s18, %s16
  $region1: #{tpu_custom_call.1} parent=0
    #allocation4 [shape = 'u8[8192]{0}', space=vmem, size = 0x2000, scoped, tag = 'input window, operand 0, single buffered']
    #allocation5 [shape = 's32[2]{0}', space=sflag, size = 0x8, scoped, tag = 'scoped memory for tpu_custom_call.1']
    #allocation6 [shape = 's32[2]{0}', space=sflag, size = 0x8, scoped, tag = 'scoped memory for tpu_custom_call.1']
    #allocation7 [shape = 'u8[8192]{0}', space=vmem, size = 0x2000, scoped, tag = 'output window, operand 0, single buffered']
    %20 = vsyncpa [#allocation5], 0
    %21 = vsyncpa [#allocation6], 0
    loop: start=0, step=1, limit=4
    $region2: #{tpu_custom_call.1} parent=1 // loop_pre_header
      _
    $region3: #{tpu_custom_call.1} parent=1 // loop_header
      %s23 = sphi 0, %s27
      %p24 = scmp.ge.s32.totalorder %s23, 4
      %s30 = sphi 0, %s42
      %s31 = sphi 0, %s38
      %s32 = sphi 0, %s30
      %s33 = sphi 0, %s31
      %s34 = sphi 0, %s32
      %s35 = sphi 0, %s33
      %s45 = sphi 0, %s47
      %s48 = sphi 0, %s45
      %s49 = sphi 0, %s48
      %s65 = sphi 0, %s49
      %s71 = sphi 0, %s73
      %s74 = sphi 0, %s71
      %s75 = sphi 0, %s74
      %s91 = sphi 0, %s75
      %s97 = sphi 0, %s99
      %s100 = sphi 0, %s97
      %s101 = sphi 0, %s100
      %s117 = sphi 0, %s101
      %s123 = sphi 0, %s125
      %s126 = sphi 0, %s123
      %s127 = sphi 0, %s126
      %s143 = sphi 0, %s127
      %s149 = sphi 0, %s151
      %s152 = sphi 0, %s149
      %s153 = sphi 0, %s152
      %s169 = sphi 0, %s153
      %s175 = sphi 0, %s177
      %s178 = sphi 0, %s175
      %s179 = sphi 0, %s178
      %s195 = sphi 0, %s179
      %s201 = sphi 0, %s203
      %s204 = sphi 0, %s201
      %s205 = sphi 0, %s204
      %s221 = sphi 0, %s205
      %s227 = sphi 0, %s229
      %s230 = sphi 0, %s227
      %s231 = sphi 0, %s230
      %s247 = sphi 0, %s231
      %s253 = sphi 0, %s255
      %s256 = sphi 0, %s253
      %s257 = sphi 0, %s256
      %s273 = sphi 0, %s257
      %s279 = sphi 0, %s281
      %s282 = sphi 0, %s279
      %s283 = sphi 0, %s282
      %s299 = sphi 0, %s283
      %s305 = sphi 0, %s307
      %s308 = sphi 0, %s305
      %s309 = sphi 0, %s308
      %s325 = sphi 0, %s309
      %s331 = sphi 0, %s333
      %s334 = sphi 0, %s331
      %s335 = sphi 0, %s334
      %s351 = sphi 0, %s335
      %s357 = sphi 0, %s359
      %s360 = sphi 0, %s357
      %s361 = sphi 0, %s360
      %s377 = sphi 0, %s361
      %s381 = sphi 0, %s381
      %s383 = sphi 0, %s381
      %s384 = sphi 0, %s383
      %s398 = sphi 0, %s384
      %s402 = sphi 0, %s402
      %s404 = sphi 0, %s402
      %s405 = sphi 0, %s404
      %s419 = sphi 0, %s405
      %s425 = sphi 0, %s427
      %s428 = sphi 0, %s425
      %s429 = sphi 0, %s428
      %s445 = sphi 0, %s429
    $region4: #{tpu_custom_call.1} parent=1 // loop_header_branch
      %26 = sbr.rel (%p24) target = $region8
    $region5: #{tpu_custom_call.1} parent=1 // loop_body
      %s28 = ssub.s32 %s23, 1
      %s29 = ssub.s32 %s23, 2
      %s36 = sadd.s32 1, %s31
      %p37 = scmp.ge.s32.totalorder %s36, 2
      %s38 = scalar_select %p37, 0, %s36
      %s39 = sadd.s32 1, %s30
      %s40 = scalar_select %p37, %s39, %s30
      %p41 = scmp.ge.s32.totalorder %s40, 1
      %s42 = scalar_select %p41, 0, %s40
      %s43 = ssub.s32 %s30, %s42
      %p44 = scmp.eq.s32.totalorder %s43, 0
      %s46 = sadd.s32 %s45, 1
      %s47 = scalar_select %p44, %s45, %s46
      %p50 = pneg %p44
      %p51 = scmp.eq.s32.totalorder %s23, 1
      %p52 = por %p50, %p51
      %p53 = scmp.ne.s32.totalorder %s45, %s48
      %p54 = scmp.eq.s32.totalorder %s23, 0
      %p55 = por %p53, %p54
      %p56 = scmp.ne.s32.totalorder %s45, %s48
      %p57 = scmp.eq.s32.totalorder %s28, 1
      %p58 = por %p56, %p57
      %p59 = scmp.ne.s32.totalorder %s48, %s49
      %p60 = scmp.eq.s32.totalorder %s28, 0
      %p61 = por %p59, %p60
      %p62 = scmp.ne.s32.totalorder %s48, %s49
      %p63 = scmp.eq.s32.totalorder %s29, 1
      %p64 = por %p62, %p63
      %p66 = scmp.ne.s32.totalorder %s49, %s65
      %p67 = scmp.eq.s32.totalorder %s29, 0
      %p68 = por %p66, %p67
      %s69 = ssub.s32 %s31, %s38
      %p70 = scmp.eq.s32.totalorder %s69, 0
      %s72 = sadd.s32 %s71, 1
      %s73 = scalar_select %p70, %s71, %s72
      %p76 = pneg %p70
      %p77 = scmp.eq.s32.totalorder %s23, 1
      %p78 = por %p76, %p77
      %p79 = scmp.ne.s32.totalorder %s71, %s74
      %p80 = scmp.eq.s32.totalorder %s23, 0
      %p81 = por %p79, %p80
      %p82 = scmp.ne.s32.totalorder %s71, %s74
      %p83 = scmp.eq.s32.totalorder %s28, 1
      %p84 = por %p82, %p83
      %p85 = scmp.ne.s32.totalorder %s74, %s75
      %p86 = scmp.eq.s32.totalorder %s28, 0
      %p87 = por %p85, %p86
      %p88 = scmp.ne.s32.totalorder %s74, %s75
      %p89 = scmp.eq.s32.totalorder %s29, 1
      %p90 = por %p88, %p89
      %p92 = scmp.ne.s32.totalorder %s75, %s91
      %p93 = scmp.eq.s32.totalorder %s29, 0
      %p94 = por %p92, %p93
      %s95 = ssub.s32 %s31, %s38
      %p96 = scmp.eq.s32.totalorder %s95, 0
      %s98 = sadd.s32 %s97, 1
      %s99 = scalar_select %p96, %s97, %s98
      %p102 = pneg %p96
      %p103 = scmp.eq.s32.totalorder %s23, 1
      %p104 = por %p102, %p103
      %p105 = scmp.ne.s32.totalorder %s97, %s100
      %p106 = scmp.eq.s32.totalorder %s23, 0
      %p107 = por %p105, %p106
      %p108 = scmp.ne.s32.totalorder %s97, %s100
      %p109 = scmp.eq.s32.totalorder %s28, 1
      %p110 = por %p108, %p109
      %p111 = scmp.ne.s32.totalorder %s100, %s101
      %p112 = scmp.eq.s32.totalorder %s28, 0
      %p113 = por %p111, %p112
      %p114 = scmp.ne.s32.totalorder %s100, %s101
      %p115 = scmp.eq.s32.totalorder %s29, 1
      %p116 = por %p114, %p115
      %p118 = scmp.ne.s32.totalorder %s101, %s117
      %p119 = scmp.eq.s32.totalorder %s29, 0
      %p120 = por %p118, %p119
      %s121 = ssub.s32 %s31, %s38
      %p122 = scmp.eq.s32.totalorder %s121, 0
      %s124 = sadd.s32 %s123, 1
      %s125 = scalar_select %p122, %s123, %s124
      %p128 = pneg %p122
      %p129 = scmp.eq.s32.totalorder %s23, 1
      %p130 = por %p128, %p129
      %p131 = scmp.ne.s32.totalorder %s123, %s126
      %p132 = scmp.eq.s32.totalorder %s23, 0
      %p133 = por %p131, %p132
      %p134 = scmp.ne.s32.totalorder %s123, %s126
      %p135 = scmp.eq.s32.totalorder %s28, 1
      %p136 = por %p134, %p135
      %p137 = scmp.ne.s32.totalorder %s126, %s127
      %p138 = scmp.eq.s32.totalorder %s28, 0
      %p139 = por %p137, %p138
      %p140 = scmp.ne.s32.totalorder %s126, %s127
      %p141 = scmp.eq.s32.totalorder %s29, 1
      %p142 = por %p140, %p141
      %p144 = scmp.ne.s32.totalorder %s127, %s143
      %p145 = scmp.eq.s32.totalorder %s29, 0
      %p146 = por %p144, %p145
      %s147 = ssub.s32 %s31, %s38
      %p148 = scmp.eq.s32.totalorder %s147, 0
      %s150 = sadd.s32 %s149, 1
      %s151 = scalar_select %p148, %s149, %s150
      %p154 = pneg %p148
      %p155 = scmp.eq.s32.totalorder %s23, 1
      %p156 = por %p154, %p155
      %p157 = scmp.ne.s32.totalorder %s149, %s152
      %p158 = scmp.eq.s32.totalorder %s23, 0
      %p159 = por %p157, %p158
      %p160 = scmp.ne.s32.totalorder %s149, %s152
      %p161 = scmp.eq.s32.totalorder %s28, 1
      %p162 = por %p160, %p161
      %p163 = scmp.ne.s32.totalorder %s152, %s153
      %p164 = scmp.eq.s32.totalorder %s28, 0
      %p165 = por %p163, %p164
      %p166 = scmp.ne.s32.totalorder %s152, %s153
      %p167 = scmp.eq.s32.totalorder %s29, 1
      %p168 = por %p166, %p167
      %p170 = scmp.ne.s32.totalorder %s153, %s169
      %p171 = scmp.eq.s32.totalorder %s29, 0
      %p172 = por %p170, %p171
      %s173 = ssub.s32 %s31, %s38
      %p174 = scmp.eq.s32.totalorder %s173, 0
      %s176 = sadd.s32 %s175, 1
      %s177 = scalar_select %p174, %s175, %s176
      %p180 = pneg %p174
      %p181 = scmp.eq.s32.totalorder %s23, 1
      %p182 = por %p180, %p181
      %p183 = scmp.ne.s32.totalorder %s175, %s178
      %p184 = scmp.eq.s32.totalorder %s23, 0
      %p185 = por %p183, %p184
      %p186 = scmp.ne.s32.totalorder %s175, %s178
      %p187 = scmp.eq.s32.totalorder %s28, 1
      %p188 = por %p186, %p187
      %p189 = scmp.ne.s32.totalorder %s178, %s179
      %p190 = scmp.eq.s32.totalorder %s28, 0
      %p191 = por %p189, %p190
      %p192 = scmp.ne.s32.totalorder %s178, %s179
      %p193 = scmp.eq.s32.totalorder %s29, 1
      %p194 = por %p192, %p193
      %p196 = scmp.ne.s32.totalorder %s179, %s195
      %p197 = scmp.eq.s32.totalorder %s29, 0
      %p198 = por %p196, %p197
      %s199 = ssub.s32 %s31, %s38
      %p200 = scmp.eq.s32.totalorder %s199, 0
      %s202 = sadd.s32 %s201, 1
      %s203 = scalar_select %p200, %s201, %s202
      %p206 = pneg %p200
      %p207 = scmp.eq.s32.totalorder %s23, 1
      %p208 = por %p206, %p207
      %p209 = scmp.ne.s32.totalorder %s201, %s204
      %p210 = scmp.eq.s32.totalorder %s23, 0
      %p211 = por %p209, %p210
      %p212 = scmp.ne.s32.totalorder %s201, %s204
      %p213 = scmp.eq.s32.totalorder %s28, 1
      %p214 = por %p212, %p213
      %p215 = scmp.ne.s32.totalorder %s204, %s205
      %p216 = scmp.eq.s32.totalorder %s28, 0
      %p217 = por %p215, %p216
      %p218 = scmp.ne.s32.totalorder %s204, %s205
      %p219 = scmp.eq.s32.totalorder %s29, 1
      %p220 = por %p218, %p219
      %p222 = scmp.ne.s32.totalorder %s205, %s221
      %p223 = scmp.eq.s32.totalorder %s29, 0
      %p224 = por %p222, %p223
      %s225 = ssub.s32 %s31, %s38
      %p226 = scmp.eq.s32.totalorder %s225, 0
      %s228 = sadd.s32 %s227, 1
      %s229 = scalar_select %p226, %s227, %s228
      %p232 = pneg %p226
      %p233 = scmp.eq.s32.totalorder %s23, 1
      %p234 = por %p232, %p233
      %p235 = scmp.ne.s32.totalorder %s227, %s230
      %p236 = scmp.eq.s32.totalorder %s23, 0
      %p237 = por %p235, %p236
      %p238 = scmp.ne.s32.totalorder %s227, %s230
      %p239 = scmp.eq.s32.totalorder %s28, 1
      %p240 = por %p238, %p239
      %p241 = scmp.ne.s32.totalorder %s230, %s231
      %p242 = scmp.eq.s32.totalorder %s28, 0
      %p243 = por %p241, %p242
      %p244 = scmp.ne.s32.totalorder %s230, %s231
      %p245 = scmp.eq.s32.totalorder %s29, 1
      %p246 = por %p244, %p245
      %p248 = scmp.ne.s32.totalorder %s231, %s247
      %p249 = scmp.eq.s32.totalorder %s29, 0
      %p250 = por %p248, %p249
      %s251 = ssub.s32 %s31, %s38
      %p252 = scmp.eq.s32.totalorder %s251, 0
      %s254 = sadd.s32 %s253, 1
      %s255 = scalar_select %p252, %s253, %s254
      %p258 = pneg %p252
      %p259 = scmp.eq.s32.totalorder %s23, 1
      %p260 = por %p258, %p259
      %p261 = scmp.ne.s32.totalorder %s253, %s256
      %p262 = scmp.eq.s32.totalorder %s23, 0
      %p263 = por %p261, %p262
      %p264 = scmp.ne.s32.totalorder %s253, %s256
      %p265 = scmp.eq.s32.totalorder %s28, 1
      %p266 = por %p264, %p265
      %p267 = scmp.ne.s32.totalorder %s256, %s257
      %p268 = scmp.eq.s32.totalorder %s28, 0
      %p269 = por %p267, %p268
      %p270 = scmp.ne.s32.totalorder %s256, %s257
      %p271 = scmp.eq.s32.totalorder %s29, 1
      %p272 = por %p270, %p271
      %p274 = scmp.ne.s32.totalorder %s257, %s273
      %p275 = scmp.eq.s32.totalorder %s29, 0
      %p276 = por %p274, %p275
      %s277 = ssub.s32 %s31, %s38
      %p278 = scmp.eq.s32.totalorder %s277, 0
      %s280 = sadd.s32 %s279, 1
      %s281 = scalar_select %p278, %s279, %s280
      %p284 = pneg %p278
      %p285 = scmp.eq.s32.totalorder %s23, 1
      %p286 = por %p284, %p285
      %p287 = scmp.ne.s32.totalorder %s279, %s282
      %p288 = scmp.eq.s32.totalorder %s23, 0
      %p289 = por %p287, %p288
      %p290 = scmp.ne.s32.totalorder %s279, %s282
      %p291 = scmp.eq.s32.totalorder %s28, 1
      %p292 = por %p290, %p291
      %p293 = scmp.ne.s32.totalorder %s282, %s283
      %p294 = scmp.eq.s32.totalorder %s28, 0
      %p295 = por %p293, %p294
      %p296 = scmp.ne.s32.totalorder %s282, %s283
      %p297 = scmp.eq.s32.totalorder %s29, 1
      %p298 = por %p296, %p297
      %p300 = scmp.ne.s32.totalorder %s283, %s299
      %p301 = scmp.eq.s32.totalorder %s29, 0
      %p302 = por %p300, %p301
      %s303 = ssub.s32 %s31, %s38
      %p304 = scmp.eq.s32.totalorder %s303, 0
      %s306 = sadd.s32 %s305, 1
      %s307 = scalar_select %p304, %s305, %s306
      %p310 = pneg %p304
      %p311 = scmp.eq.s32.totalorder %s23, 1
      %p312 = por %p310, %p311
      %p313 = scmp.ne.s32.totalorder %s305, %s308
      %p314 = scmp.eq.s32.totalorder %s23, 0
      %p315 = por %p313, %p314
      %p316 = scmp.ne.s32.totalorder %s305, %s308
      %p317 = scmp.eq.s32.totalorder %s28, 1
      %p318 = por %p316, %p317
      %p319 = scmp.ne.s32.totalorder %s308, %s309
      %p320 = scmp.eq.s32.totalorder %s28, 0
      %p321 = por %p319, %p320
      %p322 = scmp.ne.s32.totalorder %s308, %s309
      %p323 = scmp.eq.s32.totalorder %s29, 1
      %p324 = por %p322, %p323
      %p326 = scmp.ne.s32.totalorder %s309, %s325
      %p327 = scmp.eq.s32.totalorder %s29, 0
      %p328 = por %p326, %p327
      %s329 = ssub.s32 %s31, %s38
      %p330 = scmp.eq.s32.totalorder %s329, 0
      %s332 = sadd.s32 %s331, 1
      %s333 = scalar_select %p330, %s331, %s332
      %p336 = pneg %p330
      %p337 = scmp.eq.s32.totalorder %s23, 1
      %p338 = por %p336, %p337
      %p339 = scmp.ne.s32.totalorder %s331, %s334
      %p340 = scmp.eq.s32.totalorder %s23, 0
      %p341 = por %p339, %p340
      %p342 = scmp.ne.s32.totalorder %s331, %s334
      %p343 = scmp.eq.s32.totalorder %s28, 1
      %p344 = por %p342, %p343
      %p345 = scmp.ne.s32.totalorder %s334, %s335
      %p346 = scmp.eq.s32.totalorder %s28, 0
      %p347 = por %p345, %p346
      %p348 = scmp.ne.s32.totalorder %s334, %s335
      %p349 = scmp.eq.s32.totalorder %s29, 1
      %p350 = por %p348, %p349
      %p352 = scmp.ne.s32.totalorder %s335, %s351
      %p353 = scmp.eq.s32.totalorder %s29, 0
      %p354 = por %p352, %p353
      %s355 = ssub.s32 %s31, %s38
      %p356 = scmp.eq.s32.totalorder %s355, 0
      %s358 = sadd.s32 %s357, 1
      %s359 = scalar_select %p356, %s357, %s358
      %p362 = pneg %p356
      %p363 = scmp.eq.s32.totalorder %s23, 1
      %p364 = por %p362, %p363
      %p365 = scmp.ne.s32.totalorder %s357, %s360
      %p366 = scmp.eq.s32.totalorder %s23, 0
      %p367 = por %p365, %p366
      %p368 = scmp.ne.s32.totalorder %s357, %s360
      %p369 = scmp.eq.s32.totalorder %s28, 1
      %p370 = por %p368, %p369
      %p371 = scmp.ne.s32.totalorder %s360, %s361
      %p372 = scmp.eq.s32.totalorder %s28, 0
      %p373 = por %p371, %p372
      %p374 = scmp.ne.s32.totalorder %s360, %s361
      %p375 = scmp.eq.s32.totalorder %s29, 1
      %p376 = por %p374, %p375
      %p378 = scmp.ne.s32.totalorder %s361, %s377
      %p379 = scmp.eq.s32.totalorder %s29, 0
      %p380 = por %p378, %p379
      %s382 = sadd.s32 %s381, 1
      %p385 = scmp.eq.s32.totalorder %s23, 1
      %p386 = scmp.ne.s32.totalorder %s381, %s383
      %p387 = scmp.eq.s32.totalorder %s23, 0
      %p388 = por %p386, %p387
      %p389 = scmp.ne.s32.totalorder %s381, %s383
      %p390 = scmp.eq.s32.totalorder %s28, 1
      %p391 = por %p389, %p390
      %p392 = scmp.ne.s32.totalorder %s383, %s384
      %p393 = scmp.eq.s32.totalorder %s28, 0
      %p394 = por %p392, %p393
      %p395 = scmp.ne.s32.totalorder %s383, %s384
      %p396 = scmp.eq.s32.totalorder %s29, 1
      %p397 = por %p395, %p396
      %p399 = scmp.ne.s32.totalorder %s384, %s398
      %p400 = scmp.eq.s32.totalorder %s29, 0
      %p401 = por %p399, %p400
      %s403 = sadd.s32 %s402, 1
      %p406 = scmp.eq.s32.totalorder %s23, 1
      %p407 = scmp.ne.s32.totalorder %s402, %s404
      %p408 = scmp.eq.s32.totalorder %s23, 0
      %p409 = por %p407, %p408
      %p410 = scmp.ne.s32.totalorder %s402, %s404
      %p411 = scmp.eq.s32.totalorder %s28, 1
      %p412 = por %p410, %p411
      %p413 = scmp.ne.s32.totalorder %s404, %s405
      %p414 = scmp.eq.s32.totalorder %s28, 0
      %p415 = por %p413, %p414
      %p416 = scmp.ne.s32.totalorder %s404, %s405
      %p417 = scmp.eq.s32.totalorder %s29, 1
      %p418 = por %p416, %p417
      %p420 = scmp.ne.s32.totalorder %s405, %s419
      %p421 = scmp.eq.s32.totalorder %s29, 0
      %p422 = por %p420, %p421
      %s423 = ssub.s32 %s30, %s42
      %p424 = scmp.eq.s32.totalorder %s423, 0
      %s426 = sadd.s32 %s425, 1
      %s427 = scalar_select %p424, %s425, %s426
      %p430 = pneg %p424
      %p431 = scmp.eq.s32.totalorder %s23, 1
      %p432 = por %p430, %p431
      %p433 = scmp.ne.s32.totalorder %s425, %s428
      %p434 = scmp.eq.s32.totalorder %s23, 0
      %p435 = por %p433, %p434
      %p436 = scmp.ne.s32.totalorder %s425, %s428
      %p437 = scmp.eq.s32.totalorder %s28, 1
      %p438 = por %p436, %p437
      %p439 = scmp.ne.s32.totalorder %s428, %s429
      %p440 = scmp.eq.s32.totalorder %s28, 0
      %p441 = por %p439, %p440
      %p442 = scmp.ne.s32.totalorder %s428, %s429
      %p443 = scmp.eq.s32.totalorder %s29, 1
      %p444 = por %p442, %p443
      %p446 = scmp.ne.s32.totalorder %s429, %s445
      %p447 = scmp.eq.s32.totalorder %s29, 0
      %p448 = por %p446, %p447
      %p449 = scmp.le.s32.totalorder 1, %s23
      %p450 = scmp.lt.s32.totalorder %s23, 3
      %p451 = pnand %p449, %p450
      %p452 = pneg %p451
      // Predicated region
      $region9: #{tpu_custom_call.1} parent=5 // pred_check
        _
      $region10: #{tpu_custom_call.1} parent=5 // pred_check_branch
        %454 = sbr.rel (%p451) target = $region12
      $region11: #{tpu_custom_call.1} parent=5 // pred_region
        %s455 = ssub.s32 %s23, 1
        // Predicated region
        $region13: #{tpu_custom_call.1} parent=11 // pred_check
          %p456 = pneg %p61
        $region14: #{tpu_custom_call.1} parent=11 // pred_check_branch
          %458 = sbr.rel (%p456) target = $region16
        $region15: #{tpu_custom_call.1} parent=11 // pred_region
          %s459 = smul.u32 2, %s32
          %s461 = ssub.s32 256, 256
          %462 = vsyncadd [#allocation5], %s461
          %s463 = smul.addr %s459, 128
          %s464 = scalar_lea.hbm %s0, %s463
          %s465 = sshll.u32 [#allocation4], 4
          %s466 = int_to_ptr.vmem [resolvable:$true] %s465
          %471 = dma.hbm_to_vmem [thread:$0]  %s464, 256, %s466, [#allocation5], 128, 128, 8
        $region16: #{tpu_custom_call.1} parent=11 // pred_fallthru
          _
        // Predicated region
        $region17: #{tpu_custom_call.1} parent=11 // pred_check
          %p472 = pneg %p394
        $region18: #{tpu_custom_call.1} parent=11 // pred_check_branch
          %474 = sbr.rel (%p472) target = $region20
        $region19: #{tpu_custom_call.1} parent=11 // pred_region
          _
        $region20: #{tpu_custom_call.1} parent=11 // pred_fallthru
          _
        // Predicated region
        $region21: #{tpu_custom_call.1} parent=11 // pred_check
          %p475 = pneg %p415
        $region22: #{tpu_custom_call.1} parent=11 // pred_check_branch
          %477 = sbr.rel (%p475) target = $region24
        $region23: #{tpu_custom_call.1} parent=11 // pred_region
          _
        $region24: #{tpu_custom_call.1} parent=11 // pred_fallthru
          _
      $region12: #{tpu_custom_call.1} parent=5 // pred_fallthru
        _
      %p478 = scmp.lt.s32.totalorder %s23, 2
      // Predicated region
      $region25: #{tpu_custom_call.1} parent=5 // pred_check
        %p479 = pneg %p478
      $region26: #{tpu_custom_call.1} parent=5 // pred_check_branch
        %481 = sbr.rel (%p479) target = $region28
      $region27: #{tpu_custom_call.1} parent=5 // pred_region
        // Predicated region
        $region29: #{tpu_custom_call.1} parent=27 // pred_check
          %p482 = pneg %p81
        $region30: #{tpu_custom_call.1} parent=27 // pred_check_branch
          %484 = sbr.rel (%p482) target = $region32
        $region31: #{tpu_custom_call.1} parent=27 // pred_region
          %p485 = scmp.lt.s32.totalorder %s31, 1
          %s486 = scalar_select %p485, %s31, 1
          %s487 = smul.addr %s486, 4
          %s488 = smul.addr %s487, 4
          %s489 = scalar_lea.vmem %s1, %s488
        $region32: #{tpu_custom_call.1} parent=27 // pred_fallthru
          _
        // Predicated region
        $region33: #{tpu_custom_call.1} parent=27 // pred_check
          %p490 = pneg %p107
        $region34: #{tpu_custom_call.1} parent=27 // pred_check_branch
          %492 = sbr.rel (%p490) target = $region36
        $region35: #{tpu_custom_call.1} parent=27 // pred_region
          %p493 = scmp.lt.s32.totalorder %s31, 1
          %s494 = scalar_select %p493, %s31, 1
          %s495 = scalar_lea.vmem %s2, %s494
        $region36: #{tpu_custom_call.1} parent=27 // pred_fallthru
          _
        // Predicated region
        $region37: #{tpu_custom_call.1} parent=27 // pred_check
          %p496 = pneg %p133
        $region38: #{tpu_custom_call.1} parent=27 // pred_check_branch
          %498 = sbr.rel (%p496) target = $region40
        $region39: #{tpu_custom_call.1} parent=27 // pred_region
          %p499 = scmp.lt.s32.totalorder %s31, 1
          %s500 = scalar_select %p499, %s31, 1
          %s501 = smul.addr %s500, 4
          %s502 = smul.addr %s501, 4
          %s503 = scalar_lea.vmem %s3, %s502
        $region40: #{tpu_custom_call.1} parent=27 // pred_fallthru
          _
        // Predicated region
        $region41: #{tpu_custom_call.1} parent=27 // pred_check
          %p504 = pneg %p159
        $region42: #{tpu_custom_call.1} parent=27 // pred_check_branch
          %506 = sbr.rel (%p504) target = $region44
        $region43: #{tpu_custom_call.1} parent=27 // pred_region
          %p507 = scmp.lt.s32.totalorder %s31, 1
          %s508 = scalar_select %p507, %s31, 1
          %s509 = scalar_lea.vmem %s4, %s508
        $region44: #{tpu_custom_call.1} parent=27 // pred_fallthru
          _
        // Predicated region
        $region45: #{tpu_custom_call.1} parent=27 // pred_check
          %p510 = pneg %p185
        $region46: #{tpu_custom_call.1} parent=27 // pred_check_branch
          %512 = sbr.rel (%p510) target = $region48
        $region47: #{tpu_custom_call.1} parent=27 // pred_region
          %p513 = scmp.lt.s32.totalorder %s31, 1
          %s514 = scalar_select %p513, %s31, 1
          %s515 = scalar_lea.vmem %s5, %s514
        $region48: #{tpu_custom_call.1} parent=27 // pred_fallthru
          _
        // Predicated region
        $region49: #{tpu_custom_call.1} parent=27 // pred_check
          %p516 = pneg %p211
        $region50: #{tpu_custom_call.1} parent=27 // pred_check_branch
          %518 = sbr.rel (%p516) target = $region52
        $region51: #{tpu_custom_call.1} parent=27 // pred_region
          %p519 = scmp.lt.s32.totalorder %s31, 1
          %s520 = scalar_select %p519, %s31, 1
          %s521 = scalar_lea.vmem %s6, %s520
        $region52: #{tpu_custom_call.1} parent=27 // pred_fallthru
          _
        // Predicated region
        $region53: #{tpu_custom_call.1} parent=27 // pred_check
          %p522 = pneg %p237
        $region54: #{tpu_custom_call.1} parent=27 // pred_check_branch
          %524 = sbr.rel (%p522) target = $region56
        $region55: #{tpu_custom_call.1} parent=27 // pred_region
          %p525 = scmp.lt.s32.totalorder %s31, 1
          %s526 = scalar_select %p525, %s31, 1
          %s527 = smul.addr %s526, 4
          %s528 = smul.addr %s527, 4
          %s529 = scalar_lea.vmem %s7, %s528
        $region56: #{tpu_custom_call.1} parent=27 // pred_fallthru
          _
        // Predicated region
        $region57: #{tpu_custom_call.1} parent=27 // pred_check
          %p530 = pneg %p263
        $region58: #{tpu_custom_call.1} parent=27 // pred_check_branch
          %532 = sbr.rel (%p530) target = $region60
        $region59: #{tpu_custom_call.1} parent=27 // pred_region
          %p533 = scmp.lt.s32.totalorder %s31, 1
          %s534 = scalar_select %p533, %s31, 1
          %s535 = scalar_lea.vmem %s8, %s534
        $region60: #{tpu_custom_call.1} parent=27 // pred_fallthru
          _
        // Predicated region
        $region61: #{tpu_custom_call.1} parent=27 // pred_check
          %p536 = pneg %p289
        $region62: #{tpu_custom_call.1} parent=27 // pred_check_branch
          %538 = sbr.rel (%p536) target = $region64
        $region63: #{tpu_custom_call.1} parent=27 // pred_region
          %p539 = scmp.lt.s32.totalorder %s31, 1
          %s540 = scalar_select %p539, %s31, 1
          %s541 = smul.addr %s540, 8
          %s542 = smul.addr %s541, 4
          %s543 = scalar_lea.vmem %s9, %s542
        $region64: #{tpu_custom_call.1} parent=27 // pred_fallthru
          _
        // Predicated region
        $region65: #{tpu_custom_call.1} parent=27 // pred_check
          %p544 = pneg %p315
        $region66: #{tpu_custom_call.1} parent=27 // pred_check_branch
          %546 = sbr.rel (%p544) target = $region68
        $region67: #{tpu_custom_call.1} parent=27 // pred_region
          %p547 = scmp.lt.s32.totalorder %s31, 1
          %s548 = scalar_select %p547, %s31, 1
          %s549 = scalar_lea.vmem %s10, %s548
        $region68: #{tpu_custom_call.1} parent=27 // pred_fallthru
          _
        // Predicated region
        $region69: #{tpu_custom_call.1} parent=27 // pred_check
          %p550 = pneg %p341
        $region70: #{tpu_custom_call.1} parent=27 // pred_check_branch
          %552 = sbr.rel (%p550) target = $region72
        $region71: #{tpu_custom_call.1} parent=27 // pred_region
          %p553 = scmp.lt.s32.totalorder %s31, 1
          %s554 = scalar_select %p553, %s31, 1
          %s555 = scalar_lea.vmem %s11, %s554
        $region72: #{tpu_custom_call.1} parent=27 // pred_fallthru
          _
        // Predicated region
        $region73: #{tpu_custom_call.1} parent=27 // pred_check
          %p556 = pneg %p367
        $region74: #{tpu_custom_call.1} parent=27 // pred_check_branch
          %558 = sbr.rel (%p556) target = $region76
        $region75: #{tpu_custom_call.1} parent=27 // pred_region
          %p559 = scmp.lt.s32.totalorder %s31, 1
          %s560 = scalar_select %p559, %s31, 1
          %s561 = scalar_lea.vmem %s12, %s560
        $region76: #{tpu_custom_call.1} parent=27 // pred_fallthru
          _
      $region28: #{tpu_custom_call.1} parent=5 // pred_fallthru
        _
      %p562 = scmp.le.s32.totalorder 1, %s23
      %p563 = scmp.lt.s32.totalorder %s23, 3
      %p564 = pnand %p562, %p563
      %p565 = pneg %p564
      // Predicated region
      $region77: #{tpu_custom_call.1} parent=5 // pred_check
        _
      $region78: #{tpu_custom_call.1} parent=5 // pred_check_branch
        %567 = sbr.rel (%p564) target = $region80
      $region79: #{tpu_custom_call.1} parent=5 // pred_region
        %s568 = ssub.s32 %s23, 1
        // Predicated region
        $region81: #{tpu_custom_call.1} parent=79 // pred_check
          %p569 = pneg %p61
        $region82: #{tpu_custom_call.1} parent=79 // pred_check_branch
          %571 = sbr.rel (%p569) target = $region84
        $region83: #{tpu_custom_call.1} parent=79 // pred_region
          %572 = dma.done [#allocation5], 256
        $region84: #{tpu_custom_call.1} parent=79 // pred_fallthru
          _
        %p573 = pneg %p61
        %p574 = pneg %p58
        %p575 = scmp.lt.s32.totalorder %s33, 1
        %s576 = scalar_select %p575, %s33, 1
        %s577 = smul.addr %s576, 4
        %s578 = smul.addr %s577, 4
        %s579 = scalar_lea.vmem %s1, %s578
        %p580 = pneg %p87
        %p581 = pneg %p84
        %p582 = scmp.lt.s32.totalorder %s33, 1
        %s583 = scalar_select %p582, %s33, 1
        %s584 = scalar_lea.vmem %s2, %s583
        %p585 = pneg %p113
        %p586 = pneg %p110
        %p587 = scmp.lt.s32.totalorder %s33, 1
        %s588 = scalar_select %p587, %s33, 1
        %s589 = smul.addr %s588, 4
        %s590 = smul.addr %s589, 4
        %s591 = scalar_lea.vmem %s3, %s590
        %p592 = pneg %p139
        %p593 = pneg %p136
        %p594 = scmp.lt.s32.totalorder %s33, 1
        %s595 = scalar_select %p594, %s33, 1
        %s596 = scalar_lea.vmem %s4, %s595
        %p597 = pneg %p165
        %p598 = pneg %p162
        %p599 = scmp.lt.s32.totalorder %s33, 1
        %s600 = scalar_select %p599, %s33, 1
        %s601 = scalar_lea.vmem %s5, %s600
        %p602 = pneg %p191
        %p603 = pneg %p188
        %p604 = scmp.lt.s32.totalorder %s33, 1
        %s605 = scalar_select %p604, %s33, 1
        %s606 = scalar_lea.vmem %s6, %s605
        %p607 = pneg %p217
        %p608 = pneg %p214
        %p609 = scmp.lt.s32.totalorder %s33, 1
        %s610 = scalar_select %p609, %s33, 1
        %s611 = smul.addr %s610, 4
        %s612 = smul.addr %s611, 4
        %s613 = scalar_lea.vmem %s7, %s612
        %p614 = pneg %p243
        %p615 = pneg %p240
        %p616 = scmp.lt.s32.totalorder %s33, 1
        %s617 = scalar_select %p616, %s33, 1
        %s618 = scalar_lea.vmem %s8, %s617
        %p619 = pneg %p269
        %p620 = pneg %p266
        %p621 = scmp.lt.s32.totalorder %s33, 1
        %s622 = scalar_select %p621, %s33, 1
        %s623 = smul.addr %s622, 8
        %s624 = smul.addr %s623, 4
        %s625 = scalar_lea.vmem %s9, %s624
        %p626 = pneg %p295
        %p627 = pneg %p292
        %p628 = scmp.lt.s32.totalorder %s33, 1
        %s629 = scalar_select %p628, %s33, 1
        %s630 = scalar_lea.vmem %s10, %s629
        %p631 = pneg %p321
        %p632 = pneg %p318
        %p633 = scmp.lt.s32.totalorder %s33, 1
        %s634 = scalar_select %p633, %s33, 1
        %s635 = scalar_lea.vmem %s11, %s634
        %p636 = pneg %p347
        %p637 = pneg %p344
        %p638 = scmp.lt.s32.totalorder %s33, 1
        %s639 = scalar_select %p638, %s33, 1
        %s640 = scalar_lea.vmem %s12, %s639
        %p641 = pneg %p373
        %p642 = pneg %p370
        %p643 = pneg %p394
        %p644 = pneg %p391
        %p645 = pneg %p415
        %p646 = pneg %p412
        %p647 = pneg %p441
        %p648 = pneg %p438
        %s649 = smul.u32 2, %s32
        %p650 = scmp.lt.s32.totalorder %s33, 1
        %s651 = scalar_select %p650, %s33, 1
        %s652 = smul.addr %s651, 4
        %s653 = smul.addr %s652, 4
        %s654 = scalar_lea.vmem %s1, %s653
        %p655 = scmp.lt.s32.totalorder %s33, 1
        %s656 = scalar_select %p655, %s33, 1
        %s657 = scalar_lea.vmem %s2, %s656
        %p658 = scmp.lt.s32.totalorder %s33, 1
        %s659 = scalar_select %p658, %s33, 1
        %s660 = smul.addr %s659, 4
        %s661 = smul.addr %s660, 4
        %s662 = scalar_lea.vmem %s3, %s661
        %p663 = scmp.lt.s32.totalorder %s33, 1
        %s664 = scalar_select %p663, %s33, 1
        %s665 = scalar_lea.vmem %s4, %s664
        %p666 = scmp.lt.s32.totalorder %s33, 1
        %s667 = scalar_select %p666, %s33, 1
        %s668 = scalar_lea.vmem %s5, %s667
        %p669 = scmp.lt.s32.totalorder %s33, 1
        %s670 = scalar_select %p669, %s33, 1
        %s671 = scalar_lea.vmem %s6, %s670
        %p672 = scmp.lt.s32.totalorder %s33, 1
        %s673 = scalar_select %p672, %s33, 1
        %s674 = smul.addr %s673, 4
        %s675 = smul.addr %s674, 4
        %s676 = scalar_lea.vmem %s7, %s675
        %p677 = scmp.lt.s32.totalorder %s33, 1
        %s678 = scalar_select %p677, %s33, 1
        %s679 = scalar_lea.vmem %s8, %s678
        %p680 = scmp.lt.s32.totalorder %s33, 1
        %s681 = scalar_select %p680, %s33, 1
        %s682 = smul.addr %s681, 8
        %s683 = smul.addr %s682, 4
        %s684 = scalar_lea.vmem %s9, %s683
        %p685 = scmp.lt.s32.totalorder %s33, 1
        %s686 = scalar_select %p685, %s33, 1
        %s687 = scalar_lea.vmem %s10, %s686
        %p688 = scmp.lt.s32.totalorder %s33, 1
        %s689 = scalar_select %p688, %s33, 1
        %s690 = scalar_lea.vmem %s11, %s689
        %p691 = scmp.lt.s32.totalorder %s33, 1
        %s692 = scalar_select %p691, %s33, 1
        %s693 = scalar_lea.vmem %s12, %s692
        %s694 = smul.u32 2, %s32
        %p696 = scmp.eq.s32.totalorder %s33, 0
        // Predicated region
        $region85: #{tpu_custom_call.1} parent=79 // pred_check
          %p697 = pneg %p696
        $region86: #{tpu_custom_call.1} parent=79 // pred_check_branch
          %699 = sbr.rel (%p697) target = $region88
        $region87: #{tpu_custom_call.1} parent=79 // pred_region
          %v700 = vld [vmem:[#allocation4] sm:$0xff]
          %v701 = vld [vmem:[#allocation4 + $0x8] sm:$0xff]
          %vm702 = vcmask 261120
          %703 = vst.msk [vmem:[#allocation2] sm:$0xff] %vm702, %v700
          %704 = vst.msk [vmem:[#allocation2 + $0x8] sm:$0xff] %vm702, %v701
        $region88: #{tpu_custom_call.1} parent=79 // pred_fallthru
          _
        %v705 = vld [vmem:[#allocation2] sm:$0xff]
        %v706 = vld [vmem:[#allocation2 + $0x8] sm:$0xff]
        %v707 = vlaneseq
        %v708 = vshrl.u32 %v707, 7
        %v709 = vlaneseq
        %v710 = vand.u32 %v709, 127
        %vm711 = vcmp.ge.s32.totalorder %v708, %v710
        %v712 = vpack.c.bf16 %v706, %v705
        %v713 = vld [vmem:[%s654] sm:$0xf]
        %v714 = vld [vmem:[%s654 + $0x4] sm:$0xf]
        %v715 = vld [vmem:[%s654 + $0x8] sm:$0xf]
        %v716 = vld [vmem:[%s654 + $0xc] sm:$0xf]
        %v717 = vld [vmem:[%s657] sm:$0x1]
        %v719 = vlaneseq
        %v720 = vshrl.u32 %v719, 7
        %v721 = vsub.s32 0, %v720
        %v722 = vrot.slane %v717, %v721
        %v728 = vunpack.c.l.b16 %v713
        %v729 = vunpack.c.l.b16 %v714
        %v730 = vunpack.c.l.b16 %v715
        %v731 = vunpack.c.l.b16 %v716
        %v732 = vpack.c.b16 %v729, %v728
        %v733 = vpack.c.b16 %v731, %v730
        %vm736 = vcmask 261120
        %v738 = vsel %vm736, %v712, 0
        %740 = vmatprep.subr.bf16.mxu0 0
        %741 = vmatpush1.bf16.msra.mxu0 0
        %742 = vmatprep.subr.bf16.mxu0 0
        %743 = vmatpush1.bf16.msra.mxu0 0
        %744 = vmatprep.subr.bf16.mxu0 0
        %745 = vmatpush1.bf16.msra.mxu0 0
        %746 = vmatprep.subr.bf16.mxu0 0
        %747 = vmatpush1.bf16.msra.mxu0 0
        %748 = vmatprep.subr.bf16.mxu0 0
        %749 = vmatpush1.bf16.msra.mxu0 0
        %750 = vmatprep.subr.bf16.mxu0 0
        %751 = vmatpush1.bf16.msra.mxu0 0
        %752 = vmatprep.subr.bf16.mxu0 0
        %753 = vmatpush1.bf16.msra.mxu0 %v733
        %754 = vmatprep.subr.bf16.mxu0 0
        %755 = vmatpush1.bf16.msra.mxu0 %v732
        %756 = vmatprep.subr.bf16.mxu0 0
        %757 = vmatpush2.bf16.msra.mxu0 0
        %758 = vmatprep.subr.bf16.mxu0 0
        %759 = vmatpush2.bf16.msra.mxu0 0
        %760 = vmatprep.subr.bf16.mxu0 0
        %761 = vmatpush2.bf16.msra.mxu0 0
        %762 = vmatprep.subr.bf16.mxu0 0
        %763 = vmatpush2.bf16.msra.mxu0 0
        %764 = vmatprep.subr.bf16.mxu0 0
        %765 = vmatpush2.bf16.msra.mxu0 0
        %766 = vmatprep.subr.bf16.mxu0 0
        %767 = vmatpush2.bf16.msra.mxu0 0
        %768 = vmatprep.subr.bf16.mxu0 0
        %769 = vmatpush2.bf16.msra.mxu0 0
        %770 = vmatprep.subr.bf16.mxu0 0
        %771 = vmatpush2.bf16.msra.mxu0 0
        %772 = vmatprep.mubr.bf16.mxu0 0
        %773 = vmatmul.mubr.bf16.gmra.mxu0 %v738
        %v774 = vpop.f32.mrf.mxu0
        %v775 = vadd.f32 %v722, %v774
        %v776 = vpop.f32.mrf.mxu0
        %v777 = vpop.f32.mrf.mxu0
        %v778 = vadd.f32 %v722, %v777
        %v779 = vpop.f32.mrf.mxu0
        %780 = vdwg.mxu0
        %v781 = vpack.c.bf16 %v778, %v775
        %783 = vrot.lane.b32.xlu0 %v781, 96
        %v784 = vpop.permute.xlu0 %783
        %vm785 = vcmask 64512
        %v787 = vsel %vm785, %v781, 0
        %v790 = vsel %vm785, %v784, 0
        %792 = vmatprep.subr.bf16.mxu0 0
        %793 = vmatpush1.bf16.xpose.msra.mxu0 0
        %794 = vmatprep.subr.bf16.mxu0 0
        %795 = vmatpush1.bf16.xpose.msra.mxu0 0
        %796 = vmatprep.subr.bf16.mxu0 0
        %797 = vmatpush1.bf16.xpose.msra.mxu0 0
        %798 = vmatprep.subr.bf16.mxu0 0
        %799 = vmatpush1.bf16.xpose.msra.mxu0 0
        %800 = vmatprep.subr.bf16.mxu0 0
        %801 = vmatpush1.bf16.xpose.msra.mxu0 0
        %802 = vmatprep.subr.bf16.mxu0 0
        %803 = vmatpush1.bf16.xpose.msra.mxu0 0
        %804 = vmatprep.subr.bf16.mxu0 0
        %805 = vmatpush1.bf16.xpose.msra.mxu0 0
        %806 = vmatprep.subr.bf16.mxu0 0
        %807 = vmatpush1.bf16.xpose.msra.mxu0 %v790
        %808 = vmatprep.subr.bf16.mxu0 0
        %809 = vmatpush2.bf16.xpose.msra.mxu0 0
        %810 = vmatprep.subr.bf16.mxu0 0
        %811 = vmatpush2.bf16.xpose.msra.mxu0 0
        %812 = vmatprep.subr.bf16.mxu0 0
        %813 = vmatpush2.bf16.xpose.msra.mxu0 0
        %814 = vmatprep.subr.bf16.mxu0 0
        %815 = vmatpush2.bf16.xpose.msra.mxu0 0
        %816 = vmatprep.subr.bf16.mxu0 0
        %817 = vmatpush2.bf16.xpose.msra.mxu0 0
        %818 = vmatprep.subr.bf16.mxu0 0
        %819 = vmatpush2.bf16.xpose.msra.mxu0 0
        %820 = vmatprep.subr.bf16.mxu0 0
        %821 = vmatpush2.bf16.xpose.msra.mxu0 0
        %822 = vmatprep.subr.bf16.mxu0 0
        %823 = vmatpush2.bf16.xpose.msra.mxu0 0
        %824 = vmatprep.mubr.bf16.mxu0 0
        %825 = vmatmul.mubr.bf16.gmra.mxu0 %v787
        %v826 = vpop.f32.mrf.mxu0
        %v827 = vadd.f32 0.0, %v826
        %v828 = vpop.f32.mrf.mxu0
        %v829 = vpop.f32.mrf.mxu0
        %v830 = vpop.f32.mrf.mxu0
        %831 = vdwg.mxu0
        %v832 = vmul.f32 %v827, 0.35355338
        %v833 = vsel %vm711, %v832, -1e+30
        %v834 = vsel %vm785, %v833, -inf
        %835 = vmax.xlane.f32.xlu0 %v834
        %v836 = vpop.xlane.xlu0 %835
        %v837 = vsub.f32 %v833, %v836
        %v838 = vmul.f32 %v837, 1.442695
        %v839 = vpow.pop %v838
        %v840 = vsel %vm785, %v839, 0.0
        %841 = vadd.xlane.f32.xlu0 %v840
        %v842 = vpop.xlane.xlu0 %841
        %v843 = vrcp.pop %v842
        %v844 = vmul.f32 %v839, %v843
        %v845 = vpack.c.bf16 %v844, %v844
        %846 = vrot.lane.b32.xlu0 %v781, 64
        %v847 = vpop.permute.xlu0 %846
        %v849 = vsel %vm785, %v845, 0
        %vm851 = vcmask 1043456
        %v853 = vsel %vm851, %v847, 0
        %855 = vmatprep.subr.bf16.mxu0 0
        %856 = vmatpush1.bf16.msra.mxu0 0
        %857 = vmatprep.subr.bf16.mxu0 0
        %858 = vmatpush1.bf16.msra.mxu0 0
        %859 = vmatprep.subr.bf16.mxu0 0
        %860 = vmatpush1.bf16.msra.mxu0 0
        %861 = vmatprep.subr.bf16.mxu0 0
        %862 = vmatpush1.bf16.msra.mxu0 0
        %863 = vmatprep.subr.bf16.mxu0 0
        %864 = vmatpush1.bf16.msra.mxu0 0
        %865 = vmatprep.subr.bf16.mxu0 0
        %866 = vmatpush1.bf16.msra.mxu0 0
        %867 = vmatprep.subr.bf16.mxu0 0
        %868 = vmatpush1.bf16.msra.mxu0 0
        %869 = vmatprep.subr.bf16.mxu0 0
        %870 = vmatpush1.bf16.msra.mxu0 %v853
        %871 = vmatprep.subr.bf16.mxu0 0
        %872 = vmatpush2.bf16.msra.mxu0 0
        %873 = vmatprep.subr.bf16.mxu0 0
        %874 = vmatpush2.bf16.msra.mxu0 0
        %875 = vmatprep.subr.bf16.mxu0 0
        %876 = vmatpush2.bf16.msra.mxu0 0
        %877 = vmatprep.subr.bf16.mxu0 0
        %878 = vmatpush2.bf16.msra.mxu0 0
        %879 = vmatprep.subr.bf16.mxu0 0
        %880 = vmatpush2.bf16.msra.mxu0 0
        %881 = vmatprep.subr.bf16.mxu0 0
        %882 = vmatpush2.bf16.msra.mxu0 0
        %883 = vmatprep.subr.bf16.mxu0 0
        %884 = vmatpush2.bf16.msra.mxu0 0
        %885 = vmatprep.subr.bf16.mxu0 0
        %886 = vmatpush2.bf16.msra.mxu0 0
        %887 = vmatprep.mubr.bf16.mxu0 0
        %888 = vmatmul.mubr.bf16.gmra.mxu0 %v849
        %v889 = vpop.f32.mrf.mxu0
        %v890 = vadd.f32 0.0, %v889
        %v891 = vpop.f32.mrf.mxu0
        %v892 = vpop.f32.mrf.mxu0
        %v893 = vpop.f32.mrf.mxu0
        %894 = vdwg.mxu0
        %v895 = vpack.c.bf16 %v890, %v890
        %vm896 = vcmask 60416
        %897 = vst.msk [vmem:[#allocation3] sm:$0xf] %vm896, %v895
        %898 = vrot.lane.b32.xlu0 %v781, 120
        %v899 = vpop.permute.xlu0 %898
        %900 = vrot.lane.b32.xlu0 %v781, 88
        %v901 = vpop.permute.xlu0 %900
        %v903 = vsel %vm785, %v899, 0
        %v906 = vsel %vm785, %v901, 0
        %908 = vmatprep.subr.bf16.mxu0 0
        %909 = vmatpush1.bf16.xpose.msra.mxu0 0
        %910 = vmatprep.subr.bf16.mxu0 0
        %911 = vmatpush1.bf16.xpose.msra.mxu0 0
        %912 = vmatprep.subr.bf16.mxu0 0
        %913 = vmatpush1.bf16.xpose.msra.mxu0 0
        %914 = vmatprep.subr.bf16.mxu0 0
        %915 = vmatpush1.bf16.xpose.msra.mxu0 0
        %916 = vmatprep.subr.bf16.mxu0 0
        %917 = vmatpush1.bf16.xpose.msra.mxu0 0
        %918 = vmatprep.subr.bf16.mxu0 0
        %919 = vmatpush1.bf16.xpose.msra.mxu0 0
        %920 = vmatprep.subr.bf16.mxu0 0
        %921 = vmatpush1.bf16.xpose.msra.mxu0 0
        %922 = vmatprep.subr.bf16.mxu0 0
        %923 = vmatpush1.bf16.xpose.msra.mxu0 %v906
        %924 = vmatprep.subr.bf16.mxu0 0
        %925 = vmatpush2.bf16.xpose.msra.mxu0 0
        %926 = vmatprep.subr.bf16.mxu0 0
        %927 = vmatpush2.bf16.xpose.msra.mxu0 0
        %928 = vmatprep.subr.bf16.mxu0 0
        %929 = vmatpush2.bf16.xpose.msra.mxu0 0
        %930 = vmatprep.subr.bf16.mxu0 0
        %931 = vmatpush2.bf16.xpose.msra.mxu0 0
        %932 = vmatprep.subr.bf16.mxu0 0
        %933 = vmatpush2.bf16.xpose.msra.mxu0 0
        %934 = vmatprep.subr.bf16.mxu0 0
        %935 = vmatpush2.bf16.xpose.msra.mxu0 0
        %936 = vmatprep.subr.bf16.mxu0 0
        %937 = vmatpush2.bf16.xpose.msra.mxu0 0
        %938 = vmatprep.subr.bf16.mxu0 0
        %939 = vmatpush2.bf16.xpose.msra.mxu0 0
        %940 = vmatprep.mubr.bf16.mxu0 0
        %941 = vmatmul.mubr.bf16.gmra.mxu0 %v903
        %v942 = vpop.f32.mrf.mxu0
        %v943 = vadd.f32 0.0, %v942
        %v944 = vpop.f32.mrf.mxu0
        %v945 = vpop.f32.mrf.mxu0
        %v946 = vpop.f32.mrf.mxu0
        %947 = vdwg.mxu0
        %v948 = vmul.f32 %v943, 0.35355338
        %v949 = vsel %vm711, %v948, -1e+30
        %v950 = vsel %vm785, %v949, -inf
        %951 = vmax.xlane.f32.xlu0 %v950
        %v952 = vpop.xlane.xlu0 %951
        %v953 = vsub.f32 %v949, %v952
        %v954 = vmul.f32 %v953, 1.442695
        %v955 = vpow.pop %v954
        %v956 = vsel %vm785, %v955, 0.0
        %957 = vadd.xlane.f32.xlu0 %v956
        %v958 = vpop.xlane.xlu0 %957
        %v959 = vrcp.pop %v958
        %v960 = vmul.f32 %v955, %v959
        %v961 = vpack.c.bf16 %v960, %v960
        %962 = vrot.lane.b32.xlu0 %v781, 56
        %v963 = vpop.permute.xlu0 %962
        %v965 = vsel %vm785, %v961, 0
        %v968 = vsel %vm851, %v963, 0
        %970 = vmatprep.subr.bf16.mxu0 0
        %971 = vmatpush1.bf16.msra.mxu0 0
        %972 = vmatprep.subr.bf16.mxu0 0
        %973 = vmatpush1.bf16.msra.mxu0 0
        %974 = vmatprep.subr.bf16.mxu0 0
        %975 = vmatpush1.bf16.msra.mxu0 0
        %976 = vmatprep.subr.bf16.mxu0 0
        %977 = vmatpush1.bf16.msra.mxu0 0
        %978 = vmatprep.subr.bf16.mxu0 0
        %979 = vmatpush1.bf16.msra.mxu0 0
        %980 = vmatprep.subr.bf16.mxu0 0
        %981 = vmatpush1.bf16.msra.mxu0 0
        %982 = vmatprep.subr.bf16.mxu0 0
        %983 = vmatpush1.bf16.msra.mxu0 0
        %984 = vmatprep.subr.bf16.mxu0 0
        %985 = vmatpush1.bf16.msra.mxu0 %v968
        %986 = vmatprep.subr.bf16.mxu0 0
        %987 = vmatpush2.bf16.msra.mxu0 0
        %988 = vmatprep.subr.bf16.mxu0 0
        %989 = vmatpush2.bf16.msra.mxu0 0
        %990 = vmatprep.subr.bf16.mxu0 0
        %991 = vmatpush2.bf16.msra.mxu0 0
        %992 = vmatprep.subr.bf16.mxu0 0
        %993 = vmatpush2.bf16.msra.mxu0 0
        %994 = vmatprep.subr.bf16.mxu0 0
        %995 = vmatpush2.bf16.msra.mxu0 0
        %996 = vmatprep.subr.bf16.mxu0 0
        %997 = vmatpush2.bf16.msra.mxu0 0
        %998 = vmatprep.subr.bf16.mxu0 0
        %999 = vmatpush2.bf16.msra.mxu0 0
        %1000 = vmatprep.subr.bf16.mxu0 0
        %1001 = vmatpush2.bf16.msra.mxu0 0
        %1002 = vmatprep.mubr.bf16.mxu0 0
        %1003 = vmatmul.mubr.bf16.gmra.mxu0 %v965
        %v1004 = vpop.f32.mrf.mxu0
        %v1005 = vadd.f32 0.0, %v1004
        %v1006 = vpop.f32.mrf.mxu0
        %v1007 = vpop.f32.mrf.mxu0
        %v1008 = vpop.f32.mrf.mxu0
        %1009 = vdwg.mxu0
        %v1010 = vpack.c.bf16 %v1005, %v1005
        %v1012 = vunpack.c.l.b16 %v1010
        %v1013 = vpack.c.b16 %v1012, %v1012
        %1014 = vrot.lane.b32.xlu0 %v1013, 8
        %v1015 = vpop.permute.xlu0 %1014
        %vm1017 = vcmask 126016
        %1018 = vst.msk [vmem:[#allocation3] sm:$0xf] %vm1017, %v1015
        %1019 = vrot.lane.b32.xlu0 %v781, 112
        %v1020 = vpop.permute.xlu0 %1019
        %1021 = vrot.lane.b32.xlu0 %v781, 80
        %v1022 = vpop.permute.xlu0 %1021
        %v1024 = vsel %vm785, %v1020, 0
        %v1027 = vsel %vm785, %v1022, 0
        %1029 = vmatprep.subr.bf16.mxu0 0
        %1030 = vmatpush1.bf16.xpose.msra.mxu0 0
        %1031 = vmatprep.subr.bf16.mxu0 0
        %1032 = vmatpush1.bf16.xpose.msra.mxu0 0
        %1033 = vmatprep.subr.bf16.mxu0 0
        %1034 = vmatpush1.bf16.xpose.msra.mxu0 0
        %1035 = vmatprep.subr.bf16.mxu0 0
        %1036 = vmatpush1.bf16.xpose.msra.mxu0 0
        %1037 = vmatprep.subr.bf16.mxu0 0
        %1038 = vmatpush1.bf16.xpose.msra.mxu0 0
        %1039 = vmatprep.subr.bf16.mxu0 0
        %1040 = vmatpush1.bf16.xpose.msra.mxu0 0
        %1041 = vmatprep.subr.bf16.mxu0 0
        %1042 = vmatpush1.bf16.xpose.msra.mxu0 0
        %1043 = vmatprep.subr.bf16.mxu0 0
        %1044 = vmatpush1.bf16.xpose.msra.mxu0 %v1027
        %1045 = vmatprep.subr.bf16.mxu0 0
        %1046 = vmatpush2.bf16.xpose.msra.mxu0 0
        %1047 = vmatprep.subr.bf16.mxu0 0
        %1048 = vmatpush2.bf16.xpose.msra.mxu0 0
        %1049 = vmatprep.subr.bf16.mxu0 0
        %1050 = vmatpush2.bf16.xpose.msra.mxu0 0
        %1051 = vmatprep.subr.bf16.mxu0 0
        %1052 = vmatpush2.bf16.xpose.msra.mxu0 0
        %1053 = vmatprep.subr.bf16.mxu0 0
        %1054 = vmatpush2.bf16.xpose.msra.mxu0 0
        %1055 = vmatprep.subr.bf16.mxu0 0
        %1056 = vmatpush2.bf16.xpose.msra.mxu0 0
        %1057 = vmatprep.subr.bf16.mxu0 0
        %1058 = vmatpush2.bf16.xpose.msra.mxu0 0
        %1059 = vmatprep.subr.bf16.mxu0 0
        %1060 = vmatpush2.bf16.xpose.msra.mxu0 0
        %1061 = vmatprep.mubr.bf16.mxu0 0
        %1062 = vmatmul.mubr.bf16.gmra.mxu0 %v1024
        %v1063 = vpop.f32.mrf.mxu0
        %v1064 = vadd.f32 0.0, %v1063
        %v1065 = vpop.f32.mrf.mxu0
        %v1066 = vpop.f32.mrf.mxu0
        %v1067 = vpop.f32.mrf.mxu0
        %1068 = vdwg.mxu0
        %v1069 = vmul.f32 %v1064, 0.35355338
        %v1070 = vsel %vm711, %v1069, -1e+30
        %v1071 = vsel %vm785, %v1070, -inf
        %1072 = vmax.xlane.f32.xlu0 %v1071
        %v1073 = vpop.xlane.xlu0 %1072
        %v1074 = vsub.f32 %v1070, %v1073
        %v1075 = vmul.f32 %v1074, 1.442695
        %v1076 = vpow.pop %v1075
        %v1077 = vsel %vm785, %v1076, 0.0
        %1078 = vadd.xlane.f32.xlu0 %v1077
        %v1079 = vpop.xlane.xlu0 %1078
        %v1080 = vrcp.pop %v1079
        %v1081 = vmul.f32 %v1076, %v1080
        %v1082 = vpack.c.bf16 %v1081, %v1081
        %1083 = vrot.lane.b32.xlu0 %v781, 48
        %v1084 = vpop.permute.xlu0 %1083
        %v1086 = vsel %vm785, %v1082, 0
        %v1089 = vsel %vm851, %v1084, 0
        %1091 = vmatprep.subr.bf16.mxu0 0
        %1092 = vmatpush1.bf16.msra.mxu0 0
        %1093 = vmatprep.subr.bf16.mxu0 0
        %1094 = vmatpush1.bf16.msra.mxu0 0
        %1095 = vmatprep.subr.bf16.mxu0 0
        %1096 = vmatpush1.bf16.msra.mxu0 0
        %1097 = vmatprep.subr.bf16.mxu0 0
        %1098 = vmatpush1.bf16.msra.mxu0 0
        %1099 = vmatprep.subr.bf16.mxu0 0
        %1100 = vmatpush1.bf16.msra.mxu0 0
        %1101 = vmatprep.subr.bf16.mxu0 0
        %1102 = vmatpush1.bf16.msra.mxu0 0
        %1103 = vmatprep.subr.bf16.mxu0 0
        %1104 = vmatpush1.bf16.msra.mxu0 0
        %1105 = vmatprep.subr.bf16.mxu0 0
        %1106 = vmatpush1.bf16.msra.mxu0 %v1089
        %1107 = vmatprep.subr.bf16.mxu0 0
        %1108 = vmatpush2.bf16.msra.mxu0 0
        %1109 = vmatprep.subr.bf16.mxu0 0
        %1110 = vmatpush2.bf16.msra.mxu0 0
        %1111 = vmatprep.subr.bf16.mxu0 0
        %1112 = vmatpush2.bf16.msra.mxu0 0
        %1113 = vmatprep.subr.bf16.mxu0 0
        %1114 = vmatpush2.bf16.msra.mxu0 0
        %1115 = vmatprep.subr.bf16.mxu0 0
        %1116 = vmatpush2.bf16.msra.mxu0 0
        %1117 = vmatprep.subr.bf16.mxu0 0
        %1118 = vmatpush2.bf16.msra.mxu0 0
        %1119 = vmatprep.subr.bf16.mxu0 0
        %1120 = vmatpush2.bf16.msra.mxu0 0
        %1121 = vmatprep.subr.bf16.mxu0 0
        %1122 = vmatpush2.bf16.msra.mxu0 0
        %1123 = vmatprep.mubr.bf16.mxu0 0
        %1124 = vmatmul.mubr.bf16.gmra.mxu0 %v1086
        %v1125 = vpop.f32.mrf.mxu0
        %v1126 = vadd.f32 0.0, %v1125
        %v1127 = vpop.f32.mrf.mxu0
        %v1128 = vpop.f32.mrf.mxu0
        %v1129 = vpop.f32.mrf.mxu0
        %1130 = vdwg.mxu0
        %v1131 = vpack.c.bf16 %v1126, %v1126
        %v1133 = vunpack.c.l.b16 %v1131
        %v1134 = vpack.c.b16 %v1133, %v1133
        %1135 = vrot.lane.b32.xlu0 %v1134, 16
        %v1136 = vpop.permute.xlu0 %1135
        %vm1138 = vcmask 191616
        %1139 = vst.msk [vmem:[#allocation3] sm:$0xf] %vm1138, %v1136
        %1140 = vrot.lane.b32.xlu0 %v781, 104
        %v1141 = vpop.permute.xlu0 %1140
        %1142 = vrot.lane.b32.xlu0 %v781, 72
        %v1143 = vpop.permute.xlu0 %1142
        %v1145 = vsel %vm785, %v1141, 0
        %v1148 = vsel %vm785, %v1143, 0
        %1150 = vmatprep.subr.bf16.mxu0 0
        %1151 = vmatpush1.bf16.xpose.msra.mxu0 0
        %1152 = vmatprep.subr.bf16.mxu0 0
        %1153 = vmatpush1.bf16.xpose.msra.mxu0 0
        %1154 = vmatprep.subr.bf16.mxu0 0
        %1155 = vmatpush1.bf16.xpose.msra.mxu0 0
        %1156 = vmatprep.subr.bf16.mxu0 0
        %1157 = vmatpush1.bf16.xpose.msra.mxu0 0
        %1158 = vmatprep.subr.bf16.mxu0 0
        %1159 = vmatpush1.bf16.xpose.msra.mxu0 0
        %1160 = vmatprep.subr.bf16.mxu0 0
        %1161 = vmatpush1.bf16.xpose.msra.mxu0 0
        %1162 = vmatprep.subr.bf16.mxu0 0
        %1163 = vmatpush1.bf16.xpose.msra.mxu0 0
        %1164 = vmatprep.subr.bf16.mxu0 0
        %1165 = vmatpush1.bf16.xpose.msra.mxu0 %v1148
        %1166 = vmatprep.subr.bf16.mxu0 0
        %1167 = vmatpush2.bf16.xpose.msra.mxu0 0
        %1168 = vmatprep.subr.bf16.mxu0 0
        %1169 = vmatpush2.bf16.xpose.msra.mxu0 0
        %1170 = vmatprep.subr.bf16.mxu0 0
        %1171 = vmatpush2.bf16.xpose.msra.mxu0 0
        %1172 = vmatprep.subr.bf16.mxu0 0
        %1173 = vmatpush2.bf16.xpose.msra.mxu0 0
        %1174 = vmatprep.subr.bf16.mxu0 0
        %1175 = vmatpush2.bf16.xpose.msra.mxu0 0
        %1176 = vmatprep.subr.bf16.mxu0 0
        %1177 = vmatpush2.bf16.xpose.msra.mxu0 0
        %1178 = vmatprep.subr.bf16.mxu0 0
        %1179 = vmatpush2.bf16.xpose.msra.mxu0 0
        %1180 = vmatprep.subr.bf16.mxu0 0
        %1181 = vmatpush2.bf16.xpose.msra.mxu0 0
        %1182 = vmatprep.mubr.bf16.mxu0 0
        %1183 = vmatmul.mubr.bf16.gmra.mxu0 %v1145
        %v1184 = vpop.f32.mrf.mxu0
        %v1185 = vadd.f32 0.0, %v1184
        %v1186 = vpop.f32.mrf.mxu0
        %v1187 = vpop.f32.mrf.mxu0
        %v1188 = vpop.f32.mrf.mxu0
        %1189 = vdwg.mxu0
        %v1190 = vmul.f32 %v1185, 0.35355338
        %v1191 = vsel %vm711, %v1190, -1e+30
        %v1192 = vsel %vm785, %v1191, -inf
        %1193 = vmax.xlane.f32.xlu0 %v1192
        %v1194 = vpop.xlane.xlu0 %1193
        %v1195 = vsub.f32 %v1191, %v1194
        %v1196 = vmul.f32 %v1195, 1.442695
        %v1197 = vpow.pop %v1196
        %v1198 = vsel %vm785, %v1197, 0.0
        %1199 = vadd.xlane.f32.xlu0 %v1198
        %v1200 = vpop.xlane.xlu0 %1199
        %v1201 = vrcp.pop %v1200
        %v1202 = vmul.f32 %v1197, %v1201
        %v1203 = vpack.c.bf16 %v1202, %v1202
        %1204 = vrot.lane.b32.xlu0 %v781, 40
        %v1205 = vpop.permute.xlu0 %1204
        %v1207 = vsel %vm785, %v1203, 0
        %v1210 = vsel %vm851, %v1205, 0
        %1212 = vmatprep.subr.bf16.mxu0 0
        %1213 = vmatpush1.bf16.msra.mxu0 0
        %1214 = vmatprep.subr.bf16.mxu0 0
        %1215 = vmatpush1.bf16.msra.mxu0 0
        %1216 = vmatprep.subr.bf16.mxu0 0
        %1217 = vmatpush1.bf16.msra.mxu0 0
        %1218 = vmatprep.subr.bf16.mxu0 0
        %1219 = vmatpush1.bf16.msra.mxu0 0
        %1220 = vmatprep.subr.bf16.mxu0 0
        %1221 = vmatpush1.bf16.msra.mxu0 0
        %1222 = vmatprep.subr.bf16.mxu0 0
        %1223 = vmatpush1.bf16.msra.mxu0 0
        %1224 = vmatprep.subr.bf16.mxu0 0
        %1225 = vmatpush1.bf16.msra.mxu0 0
        %1226 = vmatprep.subr.bf16.mxu0 0
        %1227 = vmatpush1.bf16.msra.mxu0 %v1210
        %1228 = vmatprep.subr.bf16.mxu0 0
        %1229 = vmatpush2.bf16.msra.mxu0 0
        %1230 = vmatprep.subr.bf16.mxu0 0
        %1231 = vmatpush2.bf16.msra.mxu0 0
        %1232 = vmatprep.subr.bf16.mxu0 0
        %1233 = vmatpush2.bf16.msra.mxu0 0
        %1234 = vmatprep.subr.bf16.mxu0 0
        %1235 = vmatpush2.bf16.msra.mxu0 0
        %1236 = vmatprep.subr.bf16.mxu0 0
        %1237 = vmatpush2.bf16.msra.mxu0 0
        %1238 = vmatprep.subr.bf16.mxu0 0
        %1239 = vmatpush2.bf16.msra.mxu0 0
        %1240 = vmatprep.subr.bf16.mxu0 0
        %1241 = vmatpush2.bf16.msra.mxu0 0
        %1242 = vmatprep.subr.bf16.mxu0 0
        %1243 = vmatpush2.bf16.msra.mxu0 0
        %1244 = vmatprep.mubr.bf16.mxu0 0
        %1245 = vmatmul.mubr.bf16.gmra.mxu0 %v1207
        %v1246 = vpop.f32.mrf.mxu0
        %v1247 = vadd.f32 0.0, %v1246
        %v1248 = vpop.f32.mrf.mxu0
        %v1249 = vpop.f32.mrf.mxu0
        %v1250 = vpop.f32.mrf.mxu0
        %1251 = vdwg.mxu0
        %v1252 = vpack.c.bf16 %v1247, %v1247
        %v1254 = vunpack.c.l.b16 %v1252
        %v1255 = vpack.c.b16 %v1254, %v1254
        %1256 = vrot.lane.b32.xlu0 %v1255, 24
        %v1257 = vpop.permute.xlu0 %1256
        %vm1259 = vcmask 257216
        %1260 = vst.msk [vmem:[#allocation3] sm:$0xf] %vm1259, %v1257
        %v1261 = vrot.slane %v781, 4
        %1262 = vrot.lane.b32.xlu0 %v1261, 96
        %v1263 = vpop.permute.xlu0 %1262
        %v1265 = vsel %vm785, %v1261, 0
        %v1268 = vsel %vm785, %v1263, 0
        %1270 = vmatprep.subr.bf16.mxu0 0
        %1271 = vmatpush1.bf16.xpose.msra.mxu0 0
        %1272 = vmatprep.subr.bf16.mxu0 0
        %1273 = vmatpush1.bf16.xpose.msra.mxu0 0
        %1274 = vmatprep.subr.bf16.mxu0 0
        %1275 = vmatpush1.bf16.xpose.msra.mxu0 0
        %1276 = vmatprep.subr.bf16.mxu0 0
        %1277 = vmatpush1.bf16.xpose.msra.mxu0 0
        %1278 = vmatprep.subr.bf16.mxu0 0
        %1279 = vmatpush1.bf16.xpose.msra.mxu0 0
        %1280 = vmatprep.subr.bf16.mxu0 0
        %1281 = vmatpush1.bf16.xpose.msra.mxu0 0
        %1282 = vmatprep.subr.bf16.mxu0 0
        %1283 = vmatpush1.bf16.xpose.msra.mxu0 0
        %1284 = vmatprep.subr.bf16.mxu0 0
        %1285 = vmatpush1.bf16.xpose.msra.mxu0 %v1268
        %1286 = vmatprep.subr.bf16.mxu0 0
        %1287 = vmatpush2.bf16.xpose.msra.mxu0 0
        %1288 = vmatprep.subr.bf16.mxu0 0
        %1289 = vmatpush2.bf16.xpose.msra.mxu0 0
        %1290 = vmatprep.subr.bf16.mxu0 0
        %1291 = vmatpush2.bf16.xpose.msra.mxu0 0
        %1292 = vmatprep.subr.bf16.mxu0 0
        %1293 = vmatpush2.bf16.xpose.msra.mxu0 0
        %1294 = vmatprep.subr.bf16.mxu0 0
        %1295 = vmatpush2.bf16.xpose.msra.mxu0 0
        %1296 = vmatprep.subr.bf16.mxu0 0
        %1297 = vmatpush2.bf16.xpose.msra.mxu0 0
        %1298 = vmatprep.subr.bf16.mxu0 0
        %1299 = vmatpush2.bf16.xpose.msra.mxu0 0
        %1300 = vmatprep.subr.bf16.mxu0 0
        %1301 = vmatpush2.bf16.xpose.msra.mxu0 0
        %1302 = vmatprep.mubr.bf16.mxu0 0
        %1303 = vmatmul.mubr.bf16.gmra.mxu0 %v1265
        %v1304 = vpop.f32.mrf.mxu0
        %v1305 = vadd.f32 0.0, %v1304
        %v1306 = vpop.f32.mrf.mxu0
        %v1307 = vpop.f32.mrf.mxu0
        %v1308 = vpop.f32.mrf.mxu0
        %1309 = vdwg.mxu0
        %v1310 = vmul.f32 %v1305, 0.35355338
        %v1311 = vsel %vm711, %v1310, -1e+30
        %v1312 = vsel %vm785, %v1311, -inf
        %1313 = vmax.xlane.f32.xlu0 %v1312
        %v1314 = vpop.xlane.xlu0 %1313
        %v1315 = vsub.f32 %v1311, %v1314
        %v1316 = vmul.f32 %v1315, 1.442695
        %v1317 = vpow.pop %v1316
        %v1318 = vsel %vm785, %v1317, 0.0
        %1319 = vadd.xlane.f32.xlu0 %v1318
        %v1320 = vpop.xlane.xlu0 %1319
        %v1321 = vrcp.pop %v1320
        %v1322 = vmul.f32 %v1317, %v1321
        %v1323 = vpack.c.bf16 %v1322, %v1322
        %1324 = vrot.lane.b32.xlu0 %v1261, 64
        %v1325 = vpop.permute.xlu0 %1324
        %v1327 = vsel %vm785, %v1323, 0
        %v1330 = vsel %vm851, %v1325, 0
        %1332 = vmatprep.subr.bf16.mxu0 0
        %1333 = vmatpush1.bf16.msra.mxu0 0
        %1334 = vmatprep.subr.bf16.mxu0 0
        %1335 = vmatpush1.bf16.msra.mxu0 0
        %1336 = vmatprep.subr.bf16.mxu0 0
        %1337 = vmatpush1.bf16.msra.mxu0 0
        %1338 = vmatprep.subr.bf16.mxu0 0
        %1339 = vmatpush1.bf16.msra.mxu0 0
        %1340 = vmatprep.subr.bf16.mxu0 0
        %1341 = vmatpush1.bf16.msra.mxu0 0
        %1342 = vmatprep.subr.bf16.mxu0 0
        %1343 = vmatpush1.bf16.msra.mxu0 0
        %1344 = vmatprep.subr.bf16.mxu0 0
        %1345 = vmatpush1.bf16.msra.mxu0 0
        %1346 = vmatprep.subr.bf16.mxu0 0
        %1347 = vmatpush1.bf16.msra.mxu0 %v1330
        %1348 = vmatprep.subr.bf16.mxu0 0
        %1349 = vmatpush2.bf16.msra.mxu0 0
        %1350 = vmatprep.subr.bf16.mxu0 0
        %1351 = vmatpush2.bf16.msra.mxu0 0
        %1352 = vmatprep.subr.bf16.mxu0 0
        %1353 = vmatpush2.bf16.msra.mxu0 0
        %1354 = vmatprep.subr.bf16.mxu0 0
        %1355 = vmatpush2.bf16.msra.mxu0 0
        %1356 = vmatprep.subr.bf16.mxu0 0
        %1357 = vmatpush2.bf16.msra.mxu0 0
        %1358 = vmatprep.subr.bf16.mxu0 0
        %1359 = vmatpush2.bf16.msra.mxu0 0
        %1360 = vmatprep.subr.bf16.mxu0 0
        %1361 = vmatpush2.bf16.msra.mxu0 0
        %1362 = vmatprep.subr.bf16.mxu0 0
        %1363 = vmatpush2.bf16.msra.mxu0 0
        %1364 = vmatprep.mubr.bf16.mxu0 0
        %1365 = vmatmul.mubr.bf16.gmra.mxu0 %v1327
        %v1366 = vpop.f32.mrf.mxu0
        %v1367 = vadd.f32 0.0, %v1366
        %v1368 = vpop.f32.mrf.mxu0
        %v1369 = vpop.f32.mrf.mxu0
        %v1370 = vpop.f32.mrf.mxu0
        %1371 = vdwg.mxu0
        %v1372 = vpack.c.bf16 %v1367, %v1367
        %1373 = vst.msk [vmem:[#allocation3 + $0x4] sm:$0xf] %vm896, %v1372
        %1374 = vrot.lane.b32.xlu0 %v1261, 120
        %v1375 = vpop.permute.xlu0 %1374
        %1376 = vrot.lane.b32.xlu0 %v1261, 88
        %v1377 = vpop.permute.xlu0 %1376
        %v1379 = vsel %vm785, %v1375, 0
        %v1382 = vsel %vm785, %v1377, 0
        %1384 = vmatprep.subr.bf16.mxu0 0
        %1385 = vmatpush1.bf16.xpose.msra.mxu0 0
        %1386 = vmatprep.subr.bf16.mxu0 0
        %1387 = vmatpush1.bf16.xpose.msra.mxu0 0
        %1388 = vmatprep.subr.bf16.mxu0 0
        %1389 = vmatpush1.bf16.xpose.msra.mxu0 0
        %1390 = vmatprep.subr.bf16.mxu0 0
        %1391 = vmatpush1.bf16.xpose.msra.mxu0 0
        %1392 = vmatprep.subr.bf16.mxu0 0
        %1393 = vmatpush1.bf16.xpose.msra.mxu0 0
        %1394 = vmatprep.subr.bf16.mxu0 0
        %1395 = vmatpush1.bf16.xpose.msra.mxu0 0
        %1396 = vmatprep.subr.bf16.mxu0 0
        %1397 = vmatpush1.bf16.xpose.msra.mxu0 0
        %1398 = vmatprep.subr.bf16.mxu0 0
        %1399 = vmatpush1.bf16.xpose.msra.mxu0 %v1382
        %1400 = vmatprep.subr.bf16.mxu0 0
        %1401 = vmatpush2.bf16.xpose.msra.mxu0 0
        %1402 = vmatprep.subr.bf16.mxu0 0
        %1403 = vmatpush2.bf16.xpose.msra.mxu0 0
        %1404 = vmatprep.subr.bf16.mxu0 0
        %1405 = vmatpush2.bf16.xpose.msra.mxu0 0
        %1406 = vmatprep.subr.bf16.mxu0 0
        %1407 = vmatpush2.bf16.xpose.msra.mxu0 0
        %1408 = vmatprep.subr.bf16.mxu0 0
        %1409 = vmatpush2.bf16.xpose.msra.mxu0 0
        %1410 = vmatprep.subr.bf16.mxu0 0
        %1411 = vmatpush2.bf16.xpose.msra.mxu0 0
        %1412 = vmatprep.subr.bf16.mxu0 0
        %1413 = vmatpush2.bf16.xpose.msra.mxu0 0
        %1414 = vmatprep.subr.bf16.mxu0 0
        %1415 = vmatpush2.bf16.xpose.msra.mxu0 0
        %1416 = vmatprep.mubr.bf16.mxu0 0
        %1417 = vmatmul.mubr.bf16.gmra.mxu0 %v1379
        %v1418 = vpop.f32.mrf.mxu0
        %v1419 = vadd.f32 0.0, %v1418
        %v1420 = vpop.f32.mrf.mxu0
        %v1421 = vpop.f32.mrf.mxu0
        %v1422 = vpop.f32.mrf.mxu0
        %1423 = vdwg.mxu0
        %v1424 = vmul.f32 %v1419, 0.35355338
        %v1425 = vsel %vm711, %v1424, -1e+30
        %v1426 = vsel %vm785, %v1425, -inf
        %1427 = vmax.xlane.f32.xlu0 %v1426
        %v1428 = vpop.xlane.xlu0 %1427
        %v1429 = vsub.f32 %v1425, %v1428
        %v1430 = vmul.f32 %v1429, 1.442695
        %v1431 = vpow.pop %v1430
        %v1432 = vsel %vm785, %v1431, 0.0
        %1433 = vadd.xlane.f32.xlu0 %v1432
        %v1434 = vpop.xlane.xlu0 %1433
        %v1435 = vrcp.pop %v1434
        %v1436 = vmul.f32 %v1431, %v1435
        %v1437 = vpack.c.bf16 %v1436, %v1436
        %1438 = vrot.lane.b32.xlu0 %v1261, 56
        %v1439 = vpop.permute.xlu0 %1438
        %v1441 = vsel %vm785, %v1437, 0
        %v1444 = vsel %vm851, %v1439, 0
        %1446 = vmatprep.subr.bf16.mxu0 0
        %1447 = vmatpush1.bf16.msra.mxu0 0
        %1448 = vmatprep.subr.bf16.mxu0 0
        %1449 = vmatpush1.bf16.msra.mxu0 0
        %1450 = vmatprep.subr.bf16.mxu0 0
        %1451 = vmatpush1.bf16.msra.mxu0 0
        %1452 = vmatprep.subr.bf16.mxu0 0
        %1453 = vmatpush1.bf16.msra.mxu0 0
        %1454 = vmatprep.subr.bf16.mxu0 0
        %1455 = vmatpush1.bf16.msra.mxu0 0
        %1456 = vmatprep.subr.bf16.mxu0 0
        %1457 = vmatpush1.bf16.msra.mxu0 0
        %1458 = vmatprep.subr.bf16.mxu0 0
        %1459 = vmatpush1.bf16.msra.mxu0 0
        %1460 = vmatprep.subr.bf16.mxu0 0
        %1461 = vmatpush1.bf16.msra.mxu0 %v1444
        %1462 = vmatprep.subr.bf16.mxu0 0
        %1463 = vmatpush2.bf16.msra.mxu0 0
        %1464 = vmatprep.subr.bf16.mxu0 0
        %1465 = vmatpush2.bf16.msra.mxu0 0
        %1466 = vmatprep.subr.bf16.mxu0 0
        %1467 = vmatpush2.bf16.msra.mxu0 0
        %1468 = vmatprep.subr.bf16.mxu0 0
        %1469 = vmatpush2.bf16.msra.mxu0 0
        %1470 = vmatprep.subr.bf16.mxu0 0
        %1471 = vmatpush2.bf16.msra.mxu0 0
        %1472 = vmatprep.subr.bf16.mxu0 0
        %1473 = vmatpush2.bf16.msra.mxu0 0
        %1474 = vmatprep.subr.bf16.mxu0 0
        %1475 = vmatpush2.bf16.msra.mxu0 0
        %1476 = vmatprep.subr.bf16.mxu0 0
        %1477 = vmatpush2.bf16.msra.mxu0 0
        %1478 = vmatprep.mubr.bf16.mxu0 0
        %1479 = vmatmul.mubr.bf16.gmra.mxu0 %v1441
        %v1480 = vpop.f32.mrf.mxu0
        %v1481 = vadd.f32 0.0, %v1480
        %v1482 = vpop.f32.mrf.mxu0
        %v1483 = vpop.f32.mrf.mxu0
        %v1484 = vpop.f32.mrf.mxu0
        %1485 = vdwg.mxu0
        %v1486 = vpack.c.bf16 %v1481, %v1481
        %v1488 = vunpack.c.l.b16 %v1486
        %v1489 = vpack.c.b16 %v1488, %v1488
        %1490 = vrot.lane.b32.xlu0 %v1489, 8
        %v1491 = vpop.permute.xlu0 %1490
        %1493 = vst.msk [vmem:[#allocation3 + $0x4] sm:$0xf] %vm1017, %v1491
        %1494 = vrot.lane.b32.xlu0 %v1261, 112
        %v1495 = vpop.permute.xlu0 %1494
        %1496 = vrot.lane.b32.xlu0 %v1261, 80
        %v1497 = vpop.permute.xlu0 %1496
        %v1499 = vsel %vm785, %v1495, 0
        %v1502 = vsel %vm785, %v1497, 0
        %1504 = vmatprep.subr.bf16.mxu0 0
        %1505 = vmatpush1.bf16.xpose.msra.mxu0 0
        %1506 = vmatprep.subr.bf16.mxu0 0
        %1507 = vmatpush1.bf16.xpose.msra.mxu0 0
        %1508 = vmatprep.subr.bf16.mxu0 0
        %1509 = vmatpush1.bf16.xpose.msra.mxu0 0
        %1510 = vmatprep.subr.bf16.mxu0 0
        %1511 = vmatpush1.bf16.xpose.msra.mxu0 0
        %1512 = vmatprep.subr.bf16.mxu0 0
        %1513 = vmatpush1.bf16.xpose.msra.mxu0 0
        %1514 = vmatprep.subr.bf16.mxu0 0
        %1515 = vmatpush1.bf16.xpose.msra.mxu0 0
        %1516 = vmatprep.subr.bf16.mxu0 0
        %1517 = vmatpush1.bf16.xpose.msra.mxu0 0
        %1518 = vmatprep.subr.bf16.mxu0 0
        %1519 = vmatpush1.bf16.xpose.msra.mxu0 %v1502
        %1520 = vmatprep.subr.bf16.mxu0 0
        %1521 = vmatpush2.bf16.xpose.msra.mxu0 0
        %1522 = vmatprep.subr.bf16.mxu0 0
        %1523 = vmatpush2.bf16.xpose.msra.mxu0 0
        %1524 = vmatprep.subr.bf16.mxu0 0
        %1525 = vmatpush2.bf16.xpose.msra.mxu0 0
        %1526 = vmatprep.subr.bf16.mxu0 0
        %1527 = vmatpush2.bf16.xpose.msra.mxu0 0
        %1528 = vmatprep.subr.bf16.mxu0 0
        %1529 = vmatpush2.bf16.xpose.msra.mxu0 0
        %1530 = vmatprep.subr.bf16.mxu0 0
        %1531 = vmatpush2.bf16.xpose.msra.mxu0 0
        %1532 = vmatprep.subr.bf16.mxu0 0
        %1533 = vmatpush2.bf16.xpose.msra.mxu0 0
        %1534 = vmatprep.subr.bf16.mxu0 0
        %1535 = vmatpush2.bf16.xpose.msra.mxu0 0
        %1536 = vmatprep.mubr.bf16.mxu0 0
        %1537 = vmatmul.mubr.bf16.gmra.mxu0 %v1499
        %v1538 = vpop.f32.mrf.mxu0
        %v1539 = vadd.f32 0.0, %v1538
        %v1540 = vpop.f32.mrf.mxu0
        %v1541 = vpop.f32.mrf.mxu0
        %v1542 = vpop.f32.mrf.mxu0
        %1543 = vdwg.mxu0
        %v1544 = vmul.f32 %v1539, 0.35355338
        %v1545 = vsel %vm711, %v1544, -1e+30
        %v1546 = vsel %vm785, %v1545, -inf
        %1547 = vmax.xlane.f32.xlu0 %v1546
        %v1548 = vpop.xlane.xlu0 %1547
        %v1549 = vsub.f32 %v1545, %v1548
        %v1550 = vmul.f32 %v1549, 1.442695
        %v1551 = vpow.pop %v1550
        %v1552 = vsel %vm785, %v1551, 0.0
        %1553 = vadd.xlane.f32.xlu0 %v1552
        %v1554 = vpop.xlane.xlu0 %1553
        %v1555 = vrcp.pop %v1554
        %v1556 = vmul.f32 %v1551, %v1555
        %v1557 = vpack.c.bf16 %v1556, %v1556
        %1558 = vrot.lane.b32.xlu0 %v1261, 48
        %v1559 = vpop.permute.xlu0 %1558
        %v1561 = vsel %vm785, %v1557, 0
        %v1564 = vsel %vm851, %v1559, 0
        %1566 = vmatprep.subr.bf16.mxu0 0
        %1567 = vmatpush1.bf16.msra.mxu0 0
        %1568 = vmatprep.subr.bf16.mxu0 0
        %1569 = vmatpush1.bf16.msra.mxu0 0
        %1570 = vmatprep.subr.bf16.mxu0 0
        %1571 = vmatpush1.bf16.msra.mxu0 0
        %1572 = vmatprep.subr.bf16.mxu0 0
        %1573 = vmatpush1.bf16.msra.mxu0 0
        %1574 = vmatprep.subr.bf16.mxu0 0
        %1575 = vmatpush1.bf16.msra.mxu0 0
        %1576 = vmatprep.subr.bf16.mxu0 0
        %1577 = vmatpush1.bf16.msra.mxu0 0
        %1578 = vmatprep.subr.bf16.mxu0 0
        %1579 = vmatpush1.bf16.msra.mxu0 0
        %1580 = vmatprep.subr.bf16.mxu0 0
        %1581 = vmatpush1.bf16.msra.mxu0 %v1564
        %1582 = vmatprep.subr.bf16.mxu0 0
        %1583 = vmatpush2.bf16.msra.mxu0 0
        %1584 = vmatprep.subr.bf16.mxu0 0
        %1585 = vmatpush2.bf16.msra.mxu0 0
        %1586 = vmatprep.subr.bf16.mxu0 0
        %1587 = vmatpush2.bf16.msra.mxu0 0
        %1588 = vmatprep.subr.bf16.mxu0 0
        %1589 = vmatpush2.bf16.msra.mxu0 0
        %1590 = vmatprep.subr.bf16.mxu0 0
        %1591 = vmatpush2.bf16.msra.mxu0 0
        %1592 = vmatprep.subr.bf16.mxu0 0
        %1593 = vmatpush2.bf16.msra.mxu0 0
        %1594 = vmatprep.subr.bf16.mxu0 0
        %1595 = vmatpush2.bf16.msra.mxu0 0
        %1596 = vmatprep.subr.bf16.mxu0 0
        %1597 = vmatpush2.bf16.msra.mxu0 0
        %1598 = vmatprep.mubr.bf16.mxu0 0
        %1599 = vmatmul.mubr.bf16.gmra.mxu0 %v1561
        %v1600 = vpop.f32.mrf.mxu0
        %v1601 = vadd.f32 0.0, %v1600
        %v1602 = vpop.f32.mrf.mxu0
        %v1603 = vpop.f32.mrf.mxu0
        %v1604 = vpop.f32.mrf.mxu0
        %1605 = vdwg.mxu0
        %v1606 = vpack.c.bf16 %v1601, %v1601
        %v1608 = vunpack.c.l.b16 %v1606
        %v1609 = vpack.c.b16 %v1608, %v1608
        %1610 = vrot.lane.b32.xlu0 %v1609, 16
        %v1611 = vpop.permute.xlu0 %1610
        %1613 = vst.msk [vmem:[#allocation3 + $0x4] sm:$0xf] %vm1138, %v1611
        %1614 = vrot.lane.b32.xlu0 %v1261, 104
        %v1615 = vpop.permute.xlu0 %1614
        %1616 = vrot.lane.b32.xlu0 %v1261, 72
        %v1617 = vpop.permute.xlu0 %1616
        %v1619 = vsel %vm785, %v1615, 0
        %v1622 = vsel %vm785, %v1617, 0
        %1624 = vmatprep.subr.bf16.mxu0 0
        %1625 = vmatpush1.bf16.xpose.msra.mxu0 0
        %1626 = vmatprep.subr.bf16.mxu0 0
        %1627 = vmatpush1.bf16.xpose.msra.mxu0 0
        %1628 = vmatprep.subr.bf16.mxu0 0
        %1629 = vmatpush1.bf16.xpose.msra.mxu0 0
        %1630 = vmatprep.subr.bf16.mxu0 0
        %1631 = vmatpush1.bf16.xpose.msra.mxu0 0
        %1632 = vmatprep.subr.bf16.mxu0 0
        %1633 = vmatpush1.bf16.xpose.msra.mxu0 0
        %1634 = vmatprep.subr.bf16.mxu0 0
        %1635 = vmatpush1.bf16.xpose.msra.mxu0 0
        %1636 = vmatprep.subr.bf16.mxu0 0
        %1637 = vmatpush1.bf16.xpose.msra.mxu0 0
        %1638 = vmatprep.subr.bf16.mxu0 0
        %1639 = vmatpush1.bf16.xpose.msra.mxu0 %v1622
        %1640 = vmatprep.subr.bf16.mxu0 0
        %1641 = vmatpush2.bf16.xpose.msra.mxu0 0
        %1642 = vmatprep.subr.bf16.mxu0 0
        %1643 = vmatpush2.bf16.xpose.msra.mxu0 0
        %1644 = vmatprep.subr.bf16.mxu0 0
        %1645 = vmatpush2.bf16.xpose.msra.mxu0 0
        %1646 = vmatprep.subr.bf16.mxu0 0
        %1647 = vmatpush2.bf16.xpose.msra.mxu0 0
        %1648 = vmatprep.subr.bf16.mxu0 0
        %1649 = vmatpush2.bf16.xpose.msra.mxu0 0
        %1650 = vmatprep.subr.bf16.mxu0 0
        %1651 = vmatpush2.bf16.xpose.msra.mxu0 0
        %1652 = vmatprep.subr.bf16.mxu0 0
        %1653 = vmatpush2.bf16.xpose.msra.mxu0 0
        %1654 = vmatprep.subr.bf16.mxu0 0
        %1655 = vmatpush2.bf16.xpose.msra.mxu0 0
        %1656 = vmatprep.mubr.bf16.mxu0 0
        %1657 = vmatmul.mubr.bf16.gmra.mxu0 %v1619
        %v1658 = vpop.f32.mrf.mxu0
        %v1659 = vadd.f32 0.0, %v1658
        %v1660 = vpop.f32.mrf.mxu0
        %v1661 = vpop.f32.mrf.mxu0
        %v1662 = vpop.f32.mrf.mxu0
        %1663 = vdwg.mxu0
        %v1664 = vmul.f32 %v1659, 0.35355338
        %v1665 = vsel %vm711, %v1664, -1e+30
        %v1666 = vsel %vm785, %v1665, -inf
        %1667 = vmax.xlane.f32.xlu0 %v1666
        %v1668 = vpop.xlane.xlu0 %1667
        %v1669 = vsub.f32 %v1665, %v1668
        %v1670 = vmul.f32 %v1669, 1.442695
        %v1671 = vpow.pop %v1670
        %v1672 = vsel %vm785, %v1671, 0.0
        %1673 = vadd.xlane.f32.xlu0 %v1672
        %v1674 = vpop.xlane.xlu0 %1673
        %v1675 = vrcp.pop %v1674
        %v1676 = vmul.f32 %v1671, %v1675
        %v1677 = vpack.c.bf16 %v1676, %v1676
        %1678 = vrot.lane.b32.xlu0 %v1261, 40
        %v1679 = vpop.permute.xlu0 %1678
        %v1681 = vsel %vm785, %v1677, 0
        %v1684 = vsel %vm851, %v1679, 0
        %1686 = vmatprep.subr.bf16.mxu0 0
        %1687 = vmatpush1.bf16.msra.mxu0 0
        %1688 = vmatprep.subr.bf16.mxu0 0
        %1689 = vmatpush1.bf16.msra.mxu0 0
        %1690 = vmatprep.subr.bf16.mxu0 0
        %1691 = vmatpush1.bf16.msra.mxu0 0
        %1692 = vmatprep.subr.bf16.mxu0 0
        %1693 = vmatpush1.bf16.msra.mxu0 0
        %1694 = vmatprep.subr.bf16.mxu0 0
        %1695 = vmatpush1.bf16.msra.mxu0 0
        %1696 = vmatprep.subr.bf16.mxu0 0
        %1697 = vmatpush1.bf16.msra.mxu0 0
        %1698 = vmatprep.subr.bf16.mxu0 0
        %1699 = vmatpush1.bf16.msra.mxu0 0
        %1700 = vmatprep.subr.bf16.mxu0 0
        %1701 = vmatpush1.bf16.msra.mxu0 %v1684
        %1702 = vmatprep.subr.bf16.mxu0 0
        %1703 = vmatpush2.bf16.msra.mxu0 0
        %1704 = vmatprep.subr.bf16.mxu0 0
        %1705 = vmatpush2.bf16.msra.mxu0 0
        %1706 = vmatprep.subr.bf16.mxu0 0
        %1707 = vmatpush2.bf16.msra.mxu0 0
        %1708 = vmatprep.subr.bf16.mxu0 0
        %1709 = vmatpush2.bf16.msra.mxu0 0
        %1710 = vmatprep.subr.bf16.mxu0 0
        %1711 = vmatpush2.bf16.msra.mxu0 0
        %1712 = vmatprep.subr.bf16.mxu0 0
        %1713 = vmatpush2.bf16.msra.mxu0 0
        %1714 = vmatprep.subr.bf16.mxu0 0
        %1715 = vmatpush2.bf16.msra.mxu0 0
        %1716 = vmatprep.subr.bf16.mxu0 0
        %1717 = vmatpush2.bf16.msra.mxu0 0
        %1718 = vmatprep.mubr.bf16.mxu0 0
        %1719 = vmatmul.mubr.bf16.gmra.mxu0 %v1681
        %v1720 = vpop.f32.mrf.mxu0
        %v1721 = vadd.f32 0.0, %v1720
        %v1722 = vpop.f32.mrf.mxu0
        %v1723 = vpop.f32.mrf.mxu0
        %v1724 = vpop.f32.mrf.mxu0
        %1725 = vdwg.mxu0
        %v1726 = vpack.c.bf16 %v1721, %v1721
        %v1728 = vunpack.c.l.b16 %v1726
        %v1729 = vpack.c.b16 %v1728, %v1728
        %1730 = vrot.lane.b32.xlu0 %v1729, 24
        %v1731 = vpop.permute.xlu0 %1730
        %1733 = vst.msk [vmem:[#allocation3 + $0x4] sm:$0xf] %vm1259, %v1731
        %v1734 = vld [vmem:[#allocation3] sm:$0xf]
        %v1735 = vld [vmem:[#allocation3 + $0x4] sm:$0xf]
        %v1736 = vld [vmem:[%s662] sm:$0xf]
        %v1737 = vld [vmem:[%s662 + $0x4] sm:$0xf]
        %v1738 = vld [vmem:[%s662 + $0x8] sm:$0xf]
        %v1739 = vld [vmem:[%s662 + $0xc] sm:$0xf]
        %v1740 = vld [vmem:[%s665] sm:$0x1]
        %v1742 = vlaneseq
        %v1743 = vshrl.u32 %v1742, 7
        %v1744 = vsub.s32 0, %v1743
        %v1745 = vrot.slane %v1740, %v1744
        %v1749 = vunpack.c.l.b16 %v1734
        %v1750 = vunpack.c.l.b16 %v1735
        %v1751 = vpack.c.b16 %v1750, %v1749
        %v1756 = vunpack.c.l.b16 %v1736
        %v1757 = vunpack.c.l.b16 %v1737
        %v1758 = vunpack.c.l.b16 %v1738
        %v1759 = vunpack.c.l.b16 %v1739
        %v1760 = vpack.c.b16 %v1757, %v1756
        %v1761 = vpack.c.b16 %v1759, %v1758
        %v1765 = vsel %vm736, %v1751, 0
        %1767 = vmatprep.subr.bf16.mxu0 0
        %1768 = vmatpush1.bf16.msra.mxu0 0
        %1769 = vmatprep.subr.bf16.mxu0 0
        %1770 = vmatpush1.bf16.msra.mxu0 0
        %1771 = vmatprep.subr.bf16.mxu0 0
        %1772 = vmatpush1.bf16.msra.mxu0 0
        %1773 = vmatprep.subr.bf16.mxu0 0
        %1774 = vmatpush1.bf16.msra.mxu0 0
        %1775 = vmatprep.subr.bf16.mxu0 0
        %1776 = vmatpush1.bf16.msra.mxu0 0
        %1777 = vmatprep.subr.bf16.mxu0 0
        %1778 = vmatpush1.bf16.msra.mxu0 0
        %1779 = vmatprep.subr.bf16.mxu0 0
        %1780 = vmatpush1.bf16.msra.mxu0 %v1761
        %1781 = vmatprep.subr.bf16.mxu0 0
        %1782 = vmatpush1.bf16.msra.mxu0 %v1760
        %1783 = vmatprep.subr.bf16.mxu0 0
        %1784 = vmatpush2.bf16.msra.mxu0 0
        %1785 = vmatprep.subr.bf16.mxu0 0
        %1786 = vmatpush2.bf16.msra.mxu0 0
        %1787 = vmatprep.subr.bf16.mxu0 0
        %1788 = vmatpush2.bf16.msra.mxu0 0
        %1789 = vmatprep.subr.bf16.mxu0 0
        %1790 = vmatpush2.bf16.msra.mxu0 0
        %1791 = vmatprep.subr.bf16.mxu0 0
        %1792 = vmatpush2.bf16.msra.mxu0 0
        %1793 = vmatprep.subr.bf16.mxu0 0
        %1794 = vmatpush2.bf16.msra.mxu0 0
        %1795 = vmatprep.subr.bf16.mxu0 0
        %1796 = vmatpush2.bf16.msra.mxu0 0
        %1797 = vmatprep.subr.bf16.mxu0 0
        %1798 = vmatpush2.bf16.msra.mxu0 0
        %1799 = vmatprep.mubr.bf16.mxu0 0
        %1800 = vmatmul.mubr.bf16.gmra.mxu0 %v1765
        %v1801 = vpop.f32.mrf.mxu0
        %v1802 = vadd.f32 %v1745, %v1801
        %v1803 = vpop.f32.mrf.mxu0
        %v1804 = vpop.f32.mrf.mxu0
        %v1805 = vadd.f32 %v1745, %v1804
        %v1806 = vpop.f32.mrf.mxu0
        %1807 = vdwg.mxu0
        %v1808 = vadd.f32 %v705, %v1802
        %v1809 = vadd.f32 %v706, %v1805
        %v1810 = vld [vmem:[%s668] sm:$0x1]
        %v1811 = vld [vmem:[%s671] sm:$0x1]
        %v1812 = vsel %vm736, %v1808, 0.0
        %1813 = vadd.xlane.f32.xlu0 %v1812
        %v1814 = vpop.xlane.xlu0 %1813
        %v1815 = vsel %vm736, %v1809, 0.0
        %1816 = vadd.xlane.f32.xlu0 %v1815
        %v1817 = vpop.xlane.xlu0 %1816
        %v1818 = vrcp.pop 32.0
        %v1819 = vmul.f32 %v1814, %v1818
        %v1820 = vmul.f32 %v1817, %v1818
        %v1821 = vsub.f32 %v1808, %v1819
        %v1822 = vsub.f32 %v1809, %v1820
        %v1823 = vmul.f32 %v1821, %v1821
        %v1824 = vmul.f32 %v1822, %v1822
        %v1825 = vsel %vm736, %v1823, 0.0
        %1826 = vadd.xlane.f32.xlu0 %v1825
        %v1827 = vpop.xlane.xlu0 %1826
        %v1828 = vsel %vm736, %v1824, 0.0
        %1829 = vadd.xlane.f32.xlu0 %v1828
        %v1830 = vpop.xlane.xlu0 %1829
        %v1831 = vmul.f32 %v1827, %v1818
        %v1832 = vmul.f32 %v1830, %v1818
        %v1833 = vadd.f32 %v1831, 1e-05
        %v1834 = vadd.f32 %v1832, 1e-05
        %v1835 = vrsqrt.pop %v1833
        %v1836 = vrsqrt.pop %v1834
        %v1837 = vmul.f32 %v1821, %v1835
        %v1838 = vmul.f32 %v1822, %v1836
        %v1840 = vlaneseq
        %v1841 = vshrl.u32 %v1840, 7
        %v1842 = vsub.s32 0, %v1841
        %v1843 = vrot.slane %v1810, %v1842
        %v1845 = vmul.f32 %v1837, %v1843
        %v1846 = vmul.f32 %v1838, %v1843
        %v1848 = vlaneseq
        %v1849 = vshrl.u32 %v1848, 7
        %v1850 = vsub.s32 0, %v1849
        %v1851 = vrot.slane %v1811, %v1850
        %v1853 = vadd.f32 %v1845, %v1851
        %v1854 = vadd.f32 %v1846, %v1851
        %v1855 = vpack.c.bf16 %v1854, %v1853
        %v1856 = vld [vmem:[%s676] sm:$0xf]
        %v1857 = vld [vmem:[%s676 + $0x4] sm:$0xf]
        %v1858 = vld [vmem:[%s676 + $0x8] sm:$0xf]
        %v1859 = vld [vmem:[%s676 + $0xc] sm:$0xf]
        %v1860 = vld [vmem:[%s679] sm:$0x1]
        %v1862 = vlaneseq
        %v1863 = vshrl.u32 %v1862, 7
        %v1864 = vsub.s32 0, %v1863
        %v1865 = vrot.slane %v1860, %v1864
        %v1871 = vunpack.c.l.b16 %v1856
        %v1872 = vunpack.c.l.b16 %v1857
        %v1873 = vunpack.c.l.b16 %v1858
        %v1874 = vunpack.c.l.b16 %v1859
        %v1875 = vpack.c.b16 %v1872, %v1871
        %v1876 = vpack.c.b16 %v1874, %v1873
        %v1880 = vsel %vm736, %v1855, 0
        %1882 = vmatprep.subr.bf16.mxu0 0
        %1883 = vmatpush1.bf16.msra.mxu0 0
        %1884 = vmatprep.subr.bf16.mxu0 0
        %1885 = vmatpush1.bf16.msra.mxu0 0
        %1886 = vmatprep.subr.bf16.mxu0 0
        %1887 = vmatpush1.bf16.msra.mxu0 0
        %1888 = vmatprep.subr.bf16.mxu0 0
        %1889 = vmatpush1.bf16.msra.mxu0 0
        %1890 = vmatprep.subr.bf16.mxu0 0
        %1891 = vmatpush1.bf16.msra.mxu0 0
        %1892 = vmatprep.subr.bf16.mxu0 0
        %1893 = vmatpush1.bf16.msra.mxu0 0
        %1894 = vmatprep.subr.bf16.mxu0 0
        %1895 = vmatpush1.bf16.msra.mxu0 %v1876
        %1896 = vmatprep.subr.bf16.mxu0 0
        %1897 = vmatpush1.bf16.msra.mxu0 %v1875
        %1898 = vmatprep.subr.bf16.mxu0 0
        %1899 = vmatpush2.bf16.msra.mxu0 0
        %1900 = vmatprep.subr.bf16.mxu0 0
        %1901 = vmatpush2.bf16.msra.mxu0 0
        %1902 = vmatprep.subr.bf16.mxu0 0
        %1903 = vmatpush2.bf16.msra.mxu0 0
        %1904 = vmatprep.subr.bf16.mxu0 0
        %1905 = vmatpush2.bf16.msra.mxu0 0
        %1906 = vmatprep.subr.bf16.mxu0 0
        %1907 = vmatpush2.bf16.msra.mxu0 0
        %1908 = vmatprep.subr.bf16.mxu0 0
        %1909 = vmatpush2.bf16.msra.mxu0 0
        %1910 = vmatprep.subr.bf16.mxu0 0
        %1911 = vmatpush2.bf16.msra.mxu0 0
        %1912 = vmatprep.subr.bf16.mxu0 0
        %1913 = vmatpush2.bf16.msra.mxu0 0
        %1914 = vmatprep.mubr.bf16.mxu0 0
        %1915 = vmatmul.mubr.bf16.gmra.mxu0 %v1880
        %v1916 = vpop.f32.mrf.mxu0
        %v1917 = vadd.f32 %v1865, %v1916
        %v1918 = vpop.f32.mrf.mxu0
        %v1919 = vpop.f32.mrf.mxu0
        %v1920 = vadd.f32 %v1865, %v1919
        %v1921 = vpop.f32.mrf.mxu0
        %1922 = vdwg.mxu0
        %v1923 = vmax.f32 %v1917, 0.0
        %v1924 = vmax.f32 %v1920, 0.0
        %v1925 = vpack.c.bf16 %v1924, %v1923
        %v1926 = vld [vmem:[%s684] sm:$0xf]
        %v1927 = vld [vmem:[%s684 + $0x4] sm:$0xf]
        %v1928 = vld [vmem:[%s684 + $0x8] sm:$0xf]
        %v1929 = vld [vmem:[%s684 + $0xc] sm:$0xf]
        %v1930 = vld [vmem:[%s684 + $0x10] sm:$0xf]
        %v1931 = vld [vmem:[%s684 + $0x14] sm:$0xf]
        %v1932 = vld [vmem:[%s684 + $0x18] sm:$0xf]
        %v1933 = vld [vmem:[%s684 + $0x1c] sm:$0xf]
        %v1934 = vld [vmem:[%s687] sm:$0x1]
        %v1936 = vlaneseq
        %v1937 = vshrl.u32 %v1936, 7
        %v1938 = vsub.s32 0, %v1937
        %v1939 = vrot.slane %v1934, %v1938
        %v1949 = vunpack.c.l.b16 %v1926
        %v1950 = vunpack.c.l.b16 %v1927
        %v1951 = vunpack.c.l.b16 %v1928
        %v1952 = vunpack.c.l.b16 %v1929
        %v1953 = vunpack.c.l.b16 %v1930
        %v1954 = vunpack.c.l.b16 %v1931
        %v1955 = vunpack.c.l.b16 %v1932
        %v1956 = vunpack.c.l.b16 %v1933
        %v1957 = vpack.c.b16 %v1950, %v1949
        %v1958 = vpack.c.b16 %v1952, %v1951
        %v1959 = vpack.c.b16 %v1954, %v1953
        %v1960 = vpack.c.b16 %v1956, %v1955
        %vm1965 = vcmask 523264
        %v1967 = vsel %vm1965, %v1925, 0
        %1969 = vmatprep.subr.bf16.mxu0 0
        %1970 = vmatpush1.bf16.msra.mxu0 0
        %1971 = vmatprep.subr.bf16.mxu0 0
        %1972 = vmatpush1.bf16.msra.mxu0 0
        %1973 = vmatprep.subr.bf16.mxu0 0
        %1974 = vmatpush1.bf16.msra.mxu0 0
        %1975 = vmatprep.subr.bf16.mxu0 0
        %1976 = vmatpush1.bf16.msra.mxu0 0
        %1977 = vmatprep.subr.bf16.mxu0 0
        %1978 = vmatpush1.bf16.msra.mxu0 %v1960
        %1979 = vmatprep.subr.bf16.mxu0 0
        %1980 = vmatpush1.bf16.msra.mxu0 %v1959
        %1981 = vmatprep.subr.bf16.mxu0 0
        %1982 = vmatpush1.bf16.msra.mxu0 %v1958
        %1983 = vmatprep.subr.bf16.mxu0 0
        %1984 = vmatpush1.bf16.msra.mxu0 %v1957
        %1985 = vmatprep.subr.bf16.mxu0 0
        %1986 = vmatpush2.bf16.msra.mxu0 0
        %1987 = vmatprep.subr.bf16.mxu0 0
        %1988 = vmatpush2.bf16.msra.mxu0 0
        %1989 = vmatprep.subr.bf16.mxu0 0
        %1990 = vmatpush2.bf16.msra.mxu0 0
        %1991 = vmatprep.subr.bf16.mxu0 0
        %1992 = vmatpush2.bf16.msra.mxu0 0
        %1993 = vmatprep.subr.bf16.mxu0 0
        %1994 = vmatpush2.bf16.msra.mxu0 0
        %1995 = vmatprep.subr.bf16.mxu0 0
        %1996 = vmatpush2.bf16.msra.mxu0 0
        %1997 = vmatprep.subr.bf16.mxu0 0
        %1998 = vmatpush2.bf16.msra.mxu0 0
        %1999 = vmatprep.subr.bf16.mxu0 0
        %2000 = vmatpush2.bf16.msra.mxu0 0
        %2001 = vmatprep.mubr.bf16.mxu0 0
        %2002 = vmatmul.mubr.bf16.gmra.mxu0 %v1967
        %v2003 = vpop.f32.mrf.mxu0
        %v2004 = vadd.f32 %v1939, %v2003
        %v2005 = vpop.f32.mrf.mxu0
        %v2006 = vpop.f32.mrf.mxu0
        %v2007 = vadd.f32 %v1939, %v2006
        %v2008 = vpop.f32.mrf.mxu0
        %2009 = vdwg.mxu0
        %v2010 = vadd.f32 %v1853, %v2004
        %v2011 = vadd.f32 %v1854, %v2007
        %v2012 = vld [vmem:[%s690] sm:$0x1]
        %v2013 = vld [vmem:[%s693] sm:$0x1]
        %v2014 = vsel %vm736, %v2010, 0.0
        %2015 = vadd.xlane.f32.xlu0 %v2014
        %v2016 = vpop.xlane.xlu0 %2015
        %v2017 = vsel %vm736, %v2011, 0.0
        %2018 = vadd.xlane.f32.xlu0 %v2017
        %v2019 = vpop.xlane.xlu0 %2018
        %v2020 = vmul.f32 %v2016, %v1818
        %v2021 = vmul.f32 %v2019, %v1818
        %v2022 = vsub.f32 %v2010, %v2020
        %v2023 = vsub.f32 %v2011, %v2021
        %v2024 = vmul.f32 %v2022, %v2022
        %v2025 = vmul.f32 %v2023, %v2023
        %v2026 = vsel %vm736, %v2024, 0.0
        %2027 = vadd.xlane.f32.xlu0 %v2026
        %v2028 = vpop.xlane.xlu0 %2027
        %v2029 = vsel %vm736, %v2025, 0.0
        %2030 = vadd.xlane.f32.xlu0 %v2029
        %v2031 = vpop.xlane.xlu0 %2030
        %v2032 = vmul.f32 %v2028, %v1818
        %v2033 = vmul.f32 %v2031, %v1818
        %v2034 = vadd.f32 %v2032, 1e-05
        %v2035 = vadd.f32 %v2033, 1e-05
        %v2036 = vrsqrt.pop %v2034
        %v2037 = vrsqrt.pop %v2035
        %v2038 = vmul.f32 %v2022, %v2036
        %v2039 = vmul.f32 %v2023, %v2037
        %v2041 = vlaneseq
        %v2042 = vshrl.u32 %v2041, 7
        %v2043 = vsub.s32 0, %v2042
        %v2044 = vrot.slane %v2012, %v2043
        %v2046 = vmul.f32 %v2038, %v2044
        %v2047 = vmul.f32 %v2039, %v2044
        %v2049 = vlaneseq
        %v2050 = vshrl.u32 %v2049, 7
        %v2051 = vsub.s32 0, %v2050
        %v2052 = vrot.slane %v2013, %v2051
        %v2054 = vadd.f32 %v2046, %v2052
        %v2055 = vadd.f32 %v2047, %v2052
        %2056 = vst.msk [vmem:[#allocation2] sm:$0xff] %vm736, %v2054
        %2057 = vst.msk [vmem:[#allocation2 + $0x8] sm:$0xff] %vm736, %v2055
        %p2058 = scmp.eq.s32.totalorder %s33, 1
        // Predicated region
        $region89: #{tpu_custom_call.1} parent=79 // pred_check
          %p2059 = pneg %p2058
        $region90: #{tpu_custom_call.1} parent=79 // pred_check_branch
          %2061 = sbr.rel (%p2059) target = $region92
        $region91: #{tpu_custom_call.1} parent=79 // pred_region
          %v2062 = vld [vmem:[%s13] sm:$0x1]
          %v2063 = vld [vmem:[%s14] sm:$0x1]
          %v2064 = vsel %vm736, %v2054, 0.0
          %2065 = vadd.xlane.f32.xlu0 %v2064
          %v2066 = vpop.xlane.xlu0 %2065
          %v2067 = vsel %vm736, %v2055, 0.0
          %2068 = vadd.xlane.f32.xlu0 %v2067
          %v2069 = vpop.xlane.xlu0 %2068
          %v2070 = vmul.f32 %v2066, %v1818
          %v2071 = vmul.f32 %v2069, %v1818
          %v2072 = vsub.f32 %v2054, %v2070
          %v2073 = vsub.f32 %v2055, %v2071
          %v2074 = vmul.f32 %v2072, %v2072
          %v2075 = vmul.f32 %v2073, %v2073
          %v2076 = vsel %vm736, %v2074, 0.0
          %2077 = vadd.xlane.f32.xlu0 %v2076
          %v2078 = vpop.xlane.xlu0 %2077
          %v2079 = vsel %vm736, %v2075, 0.0
          %2080 = vadd.xlane.f32.xlu0 %v2079
          %v2081 = vpop.xlane.xlu0 %2080
          %v2082 = vmul.f32 %v2078, %v1818
          %v2083 = vmul.f32 %v2081, %v1818
          %v2084 = vadd.f32 %v2082, 1e-05
          %v2085 = vadd.f32 %v2083, 1e-05
          %v2086 = vrsqrt.pop %v2084
          %v2087 = vrsqrt.pop %v2085
          %v2088 = vmul.f32 %v2072, %v2086
          %v2089 = vmul.f32 %v2073, %v2087
          %v2091 = vlaneseq
          %v2092 = vshrl.u32 %v2091, 7
          %v2093 = vsub.s32 0, %v2092
          %v2094 = vrot.slane %v2062, %v2093
          %v2096 = vmul.f32 %v2088, %v2094
          %v2097 = vmul.f32 %v2089, %v2094
          %v2099 = vlaneseq
          %v2100 = vshrl.u32 %v2099, 7
          %v2101 = vsub.s32 0, %v2100
          %v2102 = vrot.slane %v2063, %v2101
          %v2104 = vadd.f32 %v2096, %v2102
          %v2105 = vadd.f32 %v2097, %v2102
          %2106 = vst.msk [vmem:[#allocation7] sm:$0xff] %vm736, %v2104
          %2107 = vst.msk [vmem:[#allocation7 + $0x8] sm:$0xff] %vm736, %v2105
        $region92: #{tpu_custom_call.1} parent=79 // pred_fallthru
          _
        // Predicated region
        $region93: #{tpu_custom_call.1} parent=79 // pred_check
          %p2108 = pneg %p438
        $region94: #{tpu_custom_call.1} parent=79 // pred_check_branch
          %2110 = sbr.rel (%p2108) target = $region96
        $region95: #{tpu_custom_call.1} parent=79 // pred_region
          %s2111 = smul.u32 2, %s32
          %s2113 = ssub.s32 256, 256
          %2114 = vsyncadd [#allocation6], %s2113
          %s2115 = smul.addr %s2111, 128
          %s2116 = scalar_lea.hbm %s15, %s2115
          %s2117 = sshll.u32 [#allocation7], 4
          %s2118 = int_to_ptr.vmem [resolvable:$true] %s2117
          %2123 = dma.vmem_to_hbm [thread:$0]  %s2118, 256, %s2116, [#allocation6], 128, 128, 8
        $region96: #{tpu_custom_call.1} parent=79 // pred_fallthru
          _
        // Predicated region
        $region97: #{tpu_custom_call.1} parent=79 // pred_check
          %p2124 = pneg %p438
        $region98: #{tpu_custom_call.1} parent=79 // pred_check_branch
          %2126 = sbr.rel (%p2124) target = $region100
        $region99: #{tpu_custom_call.1} parent=79 // pred_region
          %2127 = dma.done [#allocation6], 256
        $region100: #{tpu_custom_call.1} parent=79 // pred_fallthru
          _
      $region80: #{tpu_custom_call.1} parent=5 // pred_fallthru
        _
      %p2128 = scmp.le.s32.totalorder 2, %s23
      // Predicated region
      $region101: #{tpu_custom_call.1} parent=5 // pred_check
        %p2129 = pneg %p2128
      $region102: #{tpu_custom_call.1} parent=5 // pred_check_branch
        %2131 = sbr.rel (%p2129) target = $region104
      $region103: #{tpu_custom_call.1} parent=5 // pred_region
        %s2132 = ssub.s32 %s23, 2
      $region104: #{tpu_custom_call.1} parent=5 // pred_fallthru
        _
    $region6: #{tpu_custom_call.1} parent=1 // loop_footer
      %s27 = sadd.s32 1, %s23
    $region7: #{tpu_custom_call.1} parent=1 // loop_footer_branch
      %22 = sbr.rel target = $region3
    $region8: #{tpu_custom_call.1} parent=1 // loop_exit
      _
    %2133 = vsyncpa [#allocation5], 1
    %s2134 = scalar_lea.sflag [#allocation5], 1
    %2135 = vsyncpa %s2134, 1
    %2136 = vsyncpa [#allocation6], 1
    %s2137 = scalar_lea.sflag [#allocation6], 1
    %2138 = vsyncpa %s2137, 1

</llo_original>
